<compile_context>
chip_gen: v7x
topology: tpu7x:2x2x1
jax: 0.10.0
libtpu: 0.0.40
codegen_flags: <defaults>
</compile_context>

<pallas_src>
import jax
import jax.numpy as jnp
import numpy as np
from jax.experimental import pallas as pl
from jax.experimental.pallas import tpu as pltpu


# ------------------------------------------------------------------
# Fused kernel: LSTM stack + attention + FC.
# Weight layout (prepared on the host):
#   w_ih_t : (Din, 4H) bf16   gate g occupies columns [g*H, (g+1)*H), order i,f,g,o
#   w_hh_t : (H,   4H) bf16
#   b      : (1,   4H) f32    (= b_ih + b_hh)
#   w_att_t: (H, H) bf16, b_att: (1, H) f32, v: (1, H) f32
#   w_fc_t : (H, O) bf16, b_fc: (1, O) f32
# ------------------------------------------------------------------
def make_fused_kernel(num_layers, T, B, H, D):
    G = 4 * H  # packed gate width (= 128 lanes for H=32)

    def kernel(*refs):
        idx = 0
        x_ref = refs[idx]; idx += 1
        layer_refs = []
        for _ in range(num_layers):
            layer_refs.append((refs[idx], refs[idx + 1], refs[idx + 2]))
            idx += 3
        watt_ref, batt_ref, v_ref, wfc_ref, bfc_ref = refs[idx:idx + 5]
        idx += 5
        out_ref, attw_ref = refs[idx:idx + 2]
        idx += 2
        seq_refs = refs[idx:idx + num_layers]

        # Batch-major flat rows (r = b*T + t): free leading-dim reshape.
        x2d = x_ref[...].reshape(B * T, D).astype(jnp.bfloat16)

        # ---------------- stacked LSTM ----------------
        for l, (wih_ref, whh_ref, b_ref) in enumerate(layer_refs):
            if l == 0:
                inp2d = x2d                                            # (B*T, D)
            else:
                inp2d = (seq_refs[l - 1][...]
                         .reshape(B * T, H).astype(jnp.bfloat16))      # (B*T, H)

            # Hoisted, batched input projection for all T steps, bias folded in.
            xp = (jnp.dot(inp2d, wih_ref[...],
                          preferred_element_type=jnp.float32)
                  + b_ref[...])                                        # (B*T, 4H) f32
            xp3 = xp.reshape(B, T, G)                                  # free split

            whh = whh_ref[...]            # (H, 4H) bf16 — tiny, held across T
            h = jnp.zeros((B, H), jnp.float32)
            c = jnp.zeros((B, H), jnp.float32)
            out_seq = seq_refs[l]

            for t in range(T):            # static unroll, only h@w_hh is serial
                gates = xp3[:, t, :] + jnp.dot(h.astype(jnp.bfloat16), whh,
                                               preferred_element_type=jnp.float32)
                sg = jax.nn.sigmoid(gates)     # whole-vreg EUP pass (f32)
                th = jnp.tanh(gates)
                i_g = sg[:, 0 * H:1 * H]
                f_g = sg[:, 1 * H:2 * H]
                g_g = th[:, 2 * H:3 * H]
                o_g = sg[:, 3 * H:4 * H]
                c = f_g * c + i_g * g_g
                h = o_g * jnp.tanh(c)
                out_seq[:, t, :] = h                                   # (B, H)

        # ---------------- additive attention + FC (fully batched) ----------
        h_all = seq_refs[num_layers - 1][...].reshape(B * T, H)        # f32
        s = jnp.tanh(jnp.dot(h_all.astype(jnp.bfloat16), watt_ref[...],
                             preferred_element_type=jnp.float32)
                     + batt_ref[...])                                  # (B*T, H)
        s3 = s.reshape(B, T, H)
        scores3 = jnp.sum(s3 * v_ref[...], axis=-1, keepdims=True)     # (B, T, 1)

        m = jnp.max(scores3, axis=1, keepdims=True)
        e = jnp.exp(scores3 - m)
        w3 = e / jnp.sum(e, axis=1, keepdims=True)                     # (B, T, 1)

        # Output attention weights as (B, T): tiny one-time lane concat.
        attw_ref[...] = jnp.concatenate([w3[:, t, :] for t in range(T)], axis=-1)

        h3 = h_all.reshape(B, T, H)
        ctx = jnp.sum(w3 * h3, axis=1)                                 # (B, H)
        # TODO(synk): dropout on ctx is eval-mode identity here.
        out_ref[...] = (jnp.dot(ctx.astype(jnp.bfloat16), wfc_ref[...],
                                preferred_element_type=jnp.float32)
                        + bfc_ref[...])

    return kernel


def attention_lstm_forward(x, kparams):
    """x: (B, T, input_size) -> (out (B, O), attn_weights (B, T))."""
    B, T, D = x.shape
    num_layers = len(kparams["lstm"])
    H = kparams["w_att_t"].shape[0]
    O = kparams["w_fc_t"].shape[1]

    inputs = [x.astype(jnp.float32)]
    for lp in kparams["lstm"]:
        inputs += [lp["w_ih_t"], lp["w_hh_t"], lp["b"]]
    inputs += [kparams["w_att_t"], kparams["b_att"], kparams["v"],
               kparams["w_fc_t"], kparams["b_fc"]]

    kernel = make_fused_kernel(num_layers, T, B, H, D)
    vmem = pltpu.MemorySpace.VMEM
    return pl.pallas_call(
        kernel,
        out_shape=(jax.ShapeDtypeStruct((B, O), jnp.float32),
                   jax.ShapeDtypeStruct((B, T), jnp.float32)),
        in_specs=[pl.BlockSpec(memory_space=vmem) for _ in inputs],
        out_specs=(pl.BlockSpec(memory_space=vmem),
                   pl.BlockSpec(memory_space=vmem)),
        scratch_shapes=[pltpu.VMEM((B, T, H), jnp.float32)
                        for _ in range(num_layers)],
    )(*inputs)


# ------------------------------------------------------------------
# Parameter init (PyTorch layout) + host-side cast into kernel layout.
# ------------------------------------------------------------------
def init_params(key, input_size, hidden_size, num_layers, output_size):
    H = hidden_size
    k = 1.0 / np.sqrt(H)
    keys = iter(jax.random.split(key, 4 * num_layers + 5))
    lstm = []
    for layer in range(num_layers):
        d_in = input_size if layer == 0 else H
        lstm.append({
            "w_ih": jax.random.uniform(next(keys), (4 * H, d_in), jnp.float32, -k, k),
            "w_hh": jax.random.uniform(next(keys), (4 * H, H), jnp.float32, -k, k),
            "b_ih": jax.random.uniform(next(keys), (4 * H,), jnp.float32, -k, k),
            "b_hh": jax.random.uniform(next(keys), (4 * H,), jnp.float32, -k, k),
        })
    return {
        "lstm": lstm,
        "w_att": jax.random.uniform(next(keys), (H, H), jnp.float32, -k, k),
        "b_att": jax.random.uniform(next(keys), (H,), jnp.float32, -k, k),
        "v": jax.random.normal(next(keys), (H,), jnp.float32) * 0.1,
        "w_fc": jax.random.uniform(next(keys), (output_size, H), jnp.float32, -k, k),
        "b_fc": jax.random.uniform(next(keys), (output_size,), jnp.float32, -k, k),
    }


def prepare_kernel_params(params, hidden_size):
    """Transpose PyTorch weights and cast matmul operands to bf16.

    PyTorch stacks gates i|f|g|o along rows of w_ih/w_hh, so the transpose
    already gives the packed (Din, 4H) layout with each gate on a contiguous
    H-column block — no padding required (4H == 128 lanes for H == 32).
    """
    H = hidden_size
    kp = {"lstm": []}
    for lp in params["lstm"]:
        kp["lstm"].append({
            "w_ih_t": lp["w_ih"].T.astype(jnp.bfloat16),            # (Din, 4H)
            "w_hh_t": lp["w_hh"].T.astype(jnp.bfloat16),            # (H, 4H)
            "b": (lp["b_ih"] + lp["b_hh"]).reshape(1, 4 * H).astype(jnp.float32),
        })
    kp["w_att_t"] = params["w_att"].T.astype(jnp.bfloat16)          # (H, H)
    kp["b_att"] = params["b_att"].reshape(1, H).astype(jnp.float32)
    kp["v"] = params["v"].reshape(1, H).astype(jnp.float32)
    kp["w_fc_t"] = params["w_fc"].T.astype(jnp.bfloat16)            # (H, O)
    kp["b_fc"] = params["b_fc"].reshape(1, -1).astype(jnp.float32)
    return kp


# ------------------------------------------------------------------
# Pure-JAX f32 reference (numerical sanity check; PyTorch-layout params).
# ------------------------------------------------------------------
def reference_forward(x, params):
    B, T, _ = x.shape
    h_seq = x.astype(jnp.float32)
    for lp in params["lstm"]:
        H = lp["w_hh"].shape[1]
        w_ih_t, w_hh_t = lp["w_ih"].T, lp["w_hh"].T
        b = (lp["b_ih"] + lp["b_hh"])[None, :]
        h = jnp.zeros((B, H), jnp.float32)
        c = jnp.zeros((B, H), jnp.float32)
        outs = []
        for t in range(T):
            gates = h_seq[:, t, :] @ w_ih_t + h @ w_hh_t + b
            i = jax.nn.sigmoid(gates[:, :H])
            f = jax.nn.sigmoid(gates[:, H:2 * H])
            g = jnp.tanh(gates[:, 2 * H:3 * H])
            o = jax.nn.sigmoid(gates[:, 3 * H:])
            c = f * c + i * g
            h = o * jnp.tanh(c)
            outs.append(h)
        h_seq = jnp.stack(outs, axis=1)
    s = jnp.tanh(h_seq @ params["w_att"].T + params["b_att"])
    scores = s @ params["v"]
    w = jax.nn.softmax(scores, axis=1)
    context = jnp.sum(w[:, :, None] * h_seq, axis=1)
    out = context @ params["w_fc"].T + params["b_fc"]
    return out, w


if __name__ == "__main__":
    B, T = 2, 8
    input_size, hidden_size, num_layers, output_size = 4, 32, 2, 24

    key = jax.random.PRNGKey(0)
    kx, kp = jax.random.split(key)
    x = jax.random.normal(kx, (B, T, input_size), jnp.float32)
    params = init_params(kp, input_size, hidden_size, num_layers, output_size)
    kparams = prepare_kernel_params(params, hidden_size)

    out, attw = attention_lstm_forward(x, kparams)
    out = jax.block_until_ready(out)
    attw = jax.block_until_ready(attw)

    out_ref, attw_ref = reference_forward(x, params)
    assert out.shape == (B, output_size) and attw.shape == (B, T)
    # bf16 matmul operands -> loosened tolerances vs. the f32 reference.
    np.testing.assert_allclose(np.asarray(out), np.asarray(out_ref),
                               atol=3e-2, rtol=3e-2)
    np.testing.assert_allclose(np.asarray(attw), np.asarray(attw_ref),
                               atol=1e-2, rtol=1e-2)

    print("KERNEL_OK")
</pallas_src>

<mosaic_0001>
module attributes {stable_mosaic.version = 11 : i64} {
  func.func @kernel(%arg0: memref<2x8x4xf32, #tpu.memory_space<vmem>>, %arg1: memref<4x128xbf16, #tpu.memory_space<vmem>>, %arg2: memref<32x128xbf16, #tpu.memory_space<vmem>>, %arg3: memref<1x128xf32, #tpu.memory_space<vmem>>, %arg4: memref<32x128xbf16, #tpu.memory_space<vmem>>, %arg5: memref<32x128xbf16, #tpu.memory_space<vmem>>, %arg6: memref<1x128xf32, #tpu.memory_space<vmem>>, %arg7: memref<32x32xbf16, #tpu.memory_space<vmem>>, %arg8: memref<1x32xf32, #tpu.memory_space<vmem>>, %arg9: memref<1x32xf32, #tpu.memory_space<vmem>>, %arg10: memref<32x24xbf16, #tpu.memory_space<vmem>>, %arg11: memref<1x24xf32, #tpu.memory_space<vmem>>, %arg12: memref<2x24xf32, #tpu.memory_space<vmem>>, %arg13: memref<2x8xf32, #tpu.memory_space<vmem>>, %arg14: memref<2x8x32xf32, #tpu.memory_space<vmem>>, %arg15: memref<2x8x32xf32, #tpu.memory_space<vmem>>) attributes {dimension_semantics = [], scalar_prefetch = 0 : i64, scratch_operands = 2 : i64, tpu.core_type = #tpu.core_type<tc>} {
    %c0 = arith.constant 0 : index
    %c0_0 = arith.constant 0 : index
    %c0_1 = arith.constant 0 : index
    %0 = vector.load %arg0[%c0, %c0_0, %c0_1] : memref<2x8x4xf32, #tpu.memory_space<vmem>>, vector<2x8x4xf32>
    %1 = vector.shape_cast %0 : vector<2x8x4xf32> to vector<16x4xf32>
    %2 = arith.truncf %1 : vector<16x4xf32> to vector<16x4xbf16>
    %c0_2 = arith.constant 0 : index
    %c0_3 = arith.constant 0 : index
    %3 = vector.load %arg1[%c0_2, %c0_3] : memref<4x128xbf16, #tpu.memory_space<vmem>>, vector<4x128xbf16>
    %cst = arith.constant dense<0.000000e+00> : vector<16x128xf32>
    %4 = tpu.matmul %2, %3, %cst {dimension_numbers = #tpu.dot_dimension_numbers<[1], [0], [0], [1], [0, 0, 1, 1], [], []>} : vector<16x4xbf16>, vector<4x128xbf16>, vector<16x128xf32> -> vector<16x128xf32>
    %c0_4 = arith.constant 0 : index
    %c0_5 = arith.constant 0 : index
    %5 = vector.load %arg3[%c0_4, %c0_5] : memref<1x128xf32, #tpu.memory_space<vmem>>, vector<1x128xf32>
    %6 = vector.broadcast %5 : vector<1x128xf32> to vector<16x128xf32>
    %7 = arith.addf %4, %6 : vector<16x128xf32>
    %8 = vector.shape_cast %7 : vector<16x128xf32> to vector<2x8x128xf32>
    %c0_6 = arith.constant 0 : index
    %c0_7 = arith.constant 0 : index
    %9 = vector.load %arg2[%c0_6, %c0_7] : memref<32x128xbf16, #tpu.memory_space<vmem>>, vector<32x128xbf16>
    %cst_8 = arith.constant 0.000000e+00 : f32
    %10 = vector.broadcast %cst_8 : f32 to vector<2x32xf32>
    %cst_9 = arith.constant 0.000000e+00 : f32
    %11 = vector.broadcast %cst_9 : f32 to vector<2x32xf32>
    %12 = vector.extract_strided_slice %8 {offsets = [0, 0, 0], sizes = [2, 1, 128], strides = [1, 1, 1]} : vector<2x8x128xf32> to vector<2x1x128xf32>
    %13 = vector.shape_cast %12 : vector<2x1x128xf32> to vector<2x128xf32>
    %14 = arith.truncf %10 : vector<2x32xf32> to vector<2x32xbf16>
    %cst_10 = arith.constant dense<0.000000e+00> : vector<2x128xf32>
    %15 = tpu.matmul %14, %9, %cst_10 {dimension_numbers = #tpu.dot_dimension_numbers<[1], [0], [0], [1], [0, 0, 1, 1], [], []>} : vector<2x32xbf16>, vector<32x128xbf16>, vector<2x128xf32> -> vector<2x128xf32>
    %16 = arith.addf %13, %15 : vector<2x128xf32>
    %17 = arith.negf %16 : vector<2x128xf32>
    %18 = math.exp %17 : vector<2x128xf32>
    %cst_11 = arith.constant 1.000000e+00 : f32
    %19 = vector.broadcast %cst_11 : f32 to vector<2x128xf32>
    %20 = arith.addf %19, %18 : vector<2x128xf32>
    %21 = arith.divf %19, %20 : vector<2x128xf32>
    %22 = math.tanh %16 : vector<2x128xf32>
    %23 = vector.extract_strided_slice %21 {offsets = [0, 0], sizes = [2, 32], strides = [1, 1]} : vector<2x128xf32> to vector<2x32xf32>
    %24 = vector.extract_strided_slice %21 {offsets = [0, 32], sizes = [2, 32], strides = [1, 1]} : vector<2x128xf32> to vector<2x32xf32>
    %25 = vector.extract_strided_slice %22 {offsets = [0, 64], sizes = [2, 32], strides = [1, 1]} : vector<2x128xf32> to vector<2x32xf32>
    %26 = vector.extract_strided_slice %21 {offsets = [0, 96], sizes = [2, 32], strides = [1, 1]} : vector<2x128xf32> to vector<2x32xf32>
    %27 = arith.mulf %24, %11 : vector<2x32xf32>
    %28 = arith.mulf %23, %25 : vector<2x32xf32>
    %29 = arith.addf %27, %28 : vector<2x32xf32>
    %30 = math.tanh %29 : vector<2x32xf32>
    %31 = arith.mulf %26, %30 : vector<2x32xf32>
    %c0_12 = arith.constant 0 : index
    %c0_13 = arith.constant 0 : index
    %c0_14 = arith.constant 0 : index
    %32 = vector.load %arg14[%c0_12, %c0_13, %c0_14] : memref<2x8x32xf32, #tpu.memory_space<vmem>>, vector<2x1x32xf32>
    %33 = vector.shape_cast %32 : vector<2x1x32xf32> to vector<2x32xf32>
    %34 = vector.shape_cast %31 : vector<2x32xf32> to vector<2x1x32xf32>
    tpu.vector_store %arg14[%c0_12, %c0_13, %c0_14], %34 {strides = array<i32>} : memref<2x8x32xf32, #tpu.memory_space<vmem>>, vector<2x1x32xf32>,
    %35 = vector.extract_strided_slice %8 {offsets = [0, 1, 0], sizes = [2, 1, 128], strides = [1, 1, 1]} : vector<2x8x128xf32> to vector<2x1x128xf32>
    %36 = vector.shape_cast %35 : vector<2x1x128xf32> to vector<2x128xf32>
    %37 = arith.truncf %31 : vector<2x32xf32> to vector<2x32xbf16>
    %cst_15 = arith.constant dense<0.000000e+00> : vector<2x128xf32>
    %38 = tpu.matmul %37, %9, %cst_15 {dimension_numbers = #tpu.dot_dimension_numbers<[1], [0], [0], [1], [0, 0, 1, 1], [], []>} : vector<2x32xbf16>, vector<32x128xbf16>, vector<2x128xf32> -> vector<2x128xf32>
    %39 = arith.addf %36, %38 : vector<2x128xf32>
    %40 = arith.negf %39 : vector<2x128xf32>
    %41 = math.exp %40 : vector<2x128xf32>
    %cst_16 = arith.constant 1.000000e+00 : f32
    %42 = vector.broadcast %cst_16 : f32 to vector<2x128xf32>
    %43 = arith.addf %42, %41 : vector<2x128xf32>
    %44 = arith.divf %42, %43 : vector<2x128xf32>
    %45 = math.tanh %39 : vector<2x128xf32>
    %46 = vector.extract_strided_slice %44 {offsets = [0, 0], sizes = [2, 32], strides = [1, 1]} : vector<2x128xf32> to vector<2x32xf32>
    %47 = vector.extract_strided_slice %44 {offsets = [0, 32], sizes = [2, 32], strides = [1, 1]} : vector<2x128xf32> to vector<2x32xf32>
    %48 = vector.extract_strided_slice %45 {offsets = [0, 64], sizes = [2, 32], strides = [1, 1]} : vector<2x128xf32> to vector<2x32xf32>
    %49 = vector.extract_strided_slice %44 {offsets = [0, 96], sizes = [2, 32], strides = [1, 1]} : vector<2x128xf32> to vector<2x32xf32>
    %50 = arith.mulf %47, %29 : vector<2x32xf32>
    %51 = arith.mulf %46, %48 : vector<2x32xf32>
    %52 = arith.addf %50, %51 : vector<2x32xf32>
    %53 = math.tanh %52 : vector<2x32xf32>
    %54 = arith.mulf %49, %53 : vector<2x32xf32>
    %c0_17 = arith.constant 0 : index
    %c1 = arith.constant 1 : index
    %c0_18 = arith.constant 0 : index
    %55 = vector.load %arg14[%c0_17, %c1, %c0_18] : memref<2x8x32xf32, #tpu.memory_space<vmem>>, vector<2x1x32xf32>
    %56 = vector.shape_cast %55 : vector<2x1x32xf32> to vector<2x32xf32>
    %57 = vector.shape_cast %54 : vector<2x32xf32> to vector<2x1x32xf32>
    tpu.vector_store %arg14[%c0_17, %c1, %c0_18], %57 {strides = array<i32>} : memref<2x8x32xf32, #tpu.memory_space<vmem>>, vector<2x1x32xf32>,
    %58 = vector.extract_strided_slice %8 {offsets = [0, 2, 0], sizes = [2, 1, 128], strides = [1, 1, 1]} : vector<2x8x128xf32> to vector<2x1x128xf32>
    %59 = vector.shape_cast %58 : vector<2x1x128xf32> to vector<2x128xf32>
    %60 = arith.truncf %54 : vector<2x32xf32> to vector<2x32xbf16>
    %cst_19 = arith.constant dense<0.000000e+00> : vector<2x128xf32>
    %61 = tpu.matmul %60, %9, %cst_19 {dimension_numbers = #tpu.dot_dimension_numbers<[1], [0], [0], [1], [0, 0, 1, 1], [], []>} : vector<2x32xbf16>, vector<32x128xbf16>, vector<2x128xf32> -> vector<2x128xf32>
    %62 = arith.addf %59, %61 : vector<2x128xf32>
    %63 = arith.negf %62 : vector<2x128xf32>
    %64 = math.exp %63 : vector<2x128xf32>
    %cst_20 = arith.constant 1.000000e+00 : f32
    %65 = vector.broadcast %cst_20 : f32 to vector<2x128xf32>
    %66 = arith.addf %65, %64 : vector<2x128xf32>
    %67 = arith.divf %65, %66 : vector<2x128xf32>
    %68 = math.tanh %62 : vector<2x128xf32>
    %69 = vector.extract_strided_slice %67 {offsets = [0, 0], sizes = [2, 32], strides = [1, 1]} : vector<2x128xf32> to vector<2x32xf32>
    %70 = vector.extract_strided_slice %67 {offsets = [0, 32], sizes = [2, 32], strides = [1, 1]} : vector<2x128xf32> to vector<2x32xf32>
    %71 = vector.extract_strided_slice %68 {offsets = [0, 64], sizes = [2, 32], strides = [1, 1]} : vector<2x128xf32> to vector<2x32xf32>
    %72 = vector.extract_strided_slice %67 {offsets = [0, 96], sizes = [2, 32], strides = [1, 1]} : vector<2x128xf32> to vector<2x32xf32>
    %73 = arith.mulf %70, %52 : vector<2x32xf32>
    %74 = arith.mulf %69, %71 : vector<2x32xf32>
    %75 = arith.addf %73, %74 : vector<2x32xf32>
    %76 = math.tanh %75 : vector<2x32xf32>
    %77 = arith.mulf %72, %76 : vector<2x32xf32>
    %c0_21 = arith.constant 0 : index
    %c2 = arith.constant 2 : index
    %c0_22 = arith.constant 0 : index
    %78 = vector.load %arg14[%c0_21, %c2, %c0_22] : memref<2x8x32xf32, #tpu.memory_space<vmem>>, vector<2x1x32xf32>
    %79 = vector.shape_cast %78 : vector<2x1x32xf32> to vector<2x32xf32>
    %80 = vector.shape_cast %77 : vector<2x32xf32> to vector<2x1x32xf32>
    tpu.vector_store %arg14[%c0_21, %c2, %c0_22], %80 {strides = array<i32>} : memref<2x8x32xf32, #tpu.memory_space<vmem>>, vector<2x1x32xf32>,
    %81 = vector.extract_strided_slice %8 {offsets = [0, 3, 0], sizes = [2, 1, 128], strides = [1, 1, 1]} : vector<2x8x128xf32> to vector<2x1x128xf32>
    %82 = vector.shape_cast %81 : vector<2x1x128xf32> to vector<2x128xf32>
    %83 = arith.truncf %77 : vector<2x32xf32> to vector<2x32xbf16>
    %cst_23 = arith.constant dense<0.000000e+00> : vector<2x128xf32>
    %84 = tpu.matmul %83, %9, %cst_23 {dimension_numbers = #tpu.dot_dimension_numbers<[1], [0], [0], [1], [0, 0, 1, 1], [], []>} : vector<2x32xbf16>, vector<32x128xbf16>, vector<2x128xf32> -> vector<2x128xf32>
    %85 = arith.addf %82, %84 : vector<2x128xf32>
    %86 = arith.negf %85 : vector<2x128xf32>
    %87 = math.exp %86 : vector<2x128xf32>
    %cst_24 = arith.constant 1.000000e+00 : f32
    %88 = vector.broadcast %cst_24 : f32 to vector<2x128xf32>
    %89 = arith.addf %88, %87 : vector<2x128xf32>
    %90 = arith.divf %88, %89 : vector<2x128xf32>
    %91 = math.tanh %85 : vector<2x128xf32>
    %92 = vector.extract_strided_slice %90 {offsets = [0, 0], sizes = [2, 32], strides = [1, 1]} : vector<2x128xf32> to vector<2x32xf32>
    %93 = vector.extract_strided_slice %90 {offsets = [0, 32], sizes = [2, 32], strides = [1, 1]} : vector<2x128xf32> to vector<2x32xf32>
    %94 = vector.extract_strided_slice %91 {offsets = [0, 64], sizes = [2, 32], strides = [1, 1]} : vector<2x128xf32> to vector<2x32xf32>
    %95 = vector.extract_strided_slice %90 {offsets = [0, 96], sizes = [2, 32], strides = [1, 1]} : vector<2x128xf32> to vector<2x32xf32>
    %96 = arith.mulf %93, %75 : vector<2x32xf32>
    %97 = arith.mulf %92, %94 : vector<2x32xf32>
    %98 = arith.addf %96, %97 : vector<2x32xf32>
    %99 = math.tanh %98 : vector<2x32xf32>
    %100 = arith.mulf %95, %99 : vector<2x32xf32>
    %c0_25 = arith.constant 0 : index
    %c3 = arith.constant 3 : index
    %c0_26 = arith.constant 0 : index
    %101 = vector.load %arg14[%c0_25, %c3, %c0_26] : memref<2x8x32xf32, #tpu.memory_space<vmem>>, vector<2x1x32xf32>
    %102 = vector.shape_cast %101 : vector<2x1x32xf32> to vector<2x32xf32>
    %103 = vector.shape_cast %100 : vector<2x32xf32> to vector<2x1x32xf32>
    tpu.vector_store %arg14[%c0_25, %c3, %c0_26], %103 {strides = array<i32>} : memref<2x8x32xf32, #tpu.memory_space<vmem>>, vector<2x1x32xf32>,
    %104 = vector.extract_strided_slice %8 {offsets = [0, 4, 0], sizes = [2, 1, 128], strides = [1, 1, 1]} : vector<2x8x128xf32> to vector<2x1x128xf32>
    %105 = vector.shape_cast %104 : vector<2x1x128xf32> to vector<2x128xf32>
    %106 = arith.truncf %100 : vector<2x32xf32> to vector<2x32xbf16>
    %cst_27 = arith.constant dense<0.000000e+00> : vector<2x128xf32>
    %107 = tpu.matmul %106, %9, %cst_27 {dimension_numbers = #tpu.dot_dimension_numbers<[1], [0], [0], [1], [0, 0, 1, 1], [], []>} : vector<2x32xbf16>, vector<32x128xbf16>, vector<2x128xf32> -> vector<2x128xf32>
    %108 = arith.addf %105, %107 : vector<2x128xf32>
    %109 = arith.negf %108 : vector<2x128xf32>
    %110 = math.exp %109 : vector<2x128xf32>
    %cst_28 = arith.constant 1.000000e+00 : f32
    %111 = vector.broadcast %cst_28 : f32 to vector<2x128xf32>
    %112 = arith.addf %111, %110 : vector<2x128xf32>
    %113 = arith.divf %111, %112 : vector<2x128xf32>
    %114 = math.tanh %108 : vector<2x128xf32>
    %115 = vector.extract_strided_slice %113 {offsets = [0, 0], sizes = [2, 32], strides = [1, 1]} : vector<2x128xf32> to vector<2x32xf32>
    %116 = vector.extract_strided_slice %113 {offsets = [0, 32], sizes = [2, 32], strides = [1, 1]} : vector<2x128xf32> to vector<2x32xf32>
    %117 = vector.extract_strided_slice %114 {offsets = [0, 64], sizes = [2, 32], strides = [1, 1]} : vector<2x128xf32> to vector<2x32xf32>
    %118 = vector.extract_strided_slice %113 {offsets = [0, 96], sizes = [2, 32], strides = [1, 1]} : vector<2x128xf32> to vector<2x32xf32>
    %119 = arith.mulf %116, %98 : vector<2x32xf32>
    %120 = arith.mulf %115, %117 : vector<2x32xf32>
    %121 = arith.addf %119, %120 : vector<2x32xf32>
    %122 = math.tanh %121 : vector<2x32xf32>
    %123 = arith.mulf %118, %122 : vector<2x32xf32>
    %c0_29 = arith.constant 0 : index
    %c4 = arith.constant 4 : index
    %c0_30 = arith.constant 0 : index
    %124 = vector.load %arg14[%c0_29, %c4, %c0_30] : memref<2x8x32xf32, #tpu.memory_space<vmem>>, vector<2x1x32xf32>
    %125 = vector.shape_cast %124 : vector<2x1x32xf32> to vector<2x32xf32>
    %126 = vector.shape_cast %123 : vector<2x32xf32> to vector<2x1x32xf32>
    tpu.vector_store %arg14[%c0_29, %c4, %c0_30], %126 {strides = array<i32>} : memref<2x8x32xf32, #tpu.memory_space<vmem>>, vector<2x1x32xf32>,
    %127 = vector.extract_strided_slice %8 {offsets = [0, 5, 0], sizes = [2, 1, 128], strides = [1, 1, 1]} : vector<2x8x128xf32> to vector<2x1x128xf32>
    %128 = vector.shape_cast %127 : vector<2x1x128xf32> to vector<2x128xf32>
    %129 = arith.truncf %123 : vector<2x32xf32> to vector<2x32xbf16>
    %cst_31 = arith.constant dense<0.000000e+00> : vector<2x128xf32>
    %130 = tpu.matmul %129, %9, %cst_31 {dimension_numbers = #tpu.dot_dimension_numbers<[1], [0], [0], [1], [0, 0, 1, 1], [], []>} : vector<2x32xbf16>, vector<32x128xbf16>, vector<2x128xf32> -> vector<2x128xf32>
    %131 = arith.addf %128, %130 : vector<2x128xf32>
    %132 = arith.negf %131 : vector<2x128xf32>
    %133 = math.exp %132 : vector<2x128xf32>
    %cst_32 = arith.constant 1.000000e+00 : f32
    %134 = vector.broadcast %cst_32 : f32 to vector<2x128xf32>
    %135 = arith.addf %134, %133 : vector<2x128xf32>
    %136 = arith.divf %134, %135 : vector<2x128xf32>
    %137 = math.tanh %131 : vector<2x128xf32>
    %138 = vector.extract_strided_slice %136 {offsets = [0, 0], sizes = [2, 32], strides = [1, 1]} : vector<2x128xf32> to vector<2x32xf32>
    %139 = vector.extract_strided_slice %136 {offsets = [0, 32], sizes = [2, 32], strides = [1, 1]} : vector<2x128xf32> to vector<2x32xf32>
    %140 = vector.extract_strided_slice %137 {offsets = [0, 64], sizes = [2, 32], strides = [1, 1]} : vector<2x128xf32> to vector<2x32xf32>
    %141 = vector.extract_strided_slice %136 {offsets = [0, 96], sizes = [2, 32], strides = [1, 1]} : vector<2x128xf32> to vector<2x32xf32>
    %142 = arith.mulf %139, %121 : vector<2x32xf32>
    %143 = arith.mulf %138, %140 : vector<2x32xf32>
    %144 = arith.addf %142, %143 : vector<2x32xf32>
    %145 = math.tanh %144 : vector<2x32xf32>
    %146 = arith.mulf %141, %145 : vector<2x32xf32>
    %c0_33 = arith.constant 0 : index
    %c5 = arith.constant 5 : index
    %c0_34 = arith.constant 0 : index
    %147 = vector.load %arg14[%c0_33, %c5, %c0_34] : memref<2x8x32xf32, #tpu.memory_space<vmem>>, vector<2x1x32xf32>
    %148 = vector.shape_cast %147 : vector<2x1x32xf32> to vector<2x32xf32>
    %149 = vector.shape_cast %146 : vector<2x32xf32> to vector<2x1x32xf32>
    tpu.vector_store %arg14[%c0_33, %c5, %c0_34], %149 {strides = array<i32>} : memref<2x8x32xf32, #tpu.memory_space<vmem>>, vector<2x1x32xf32>,
    %150 = vector.extract_strided_slice %8 {offsets = [0, 6, 0], sizes = [2, 1, 128], strides = [1, 1, 1]} : vector<2x8x128xf32> to vector<2x1x128xf32>
    %151 = vector.shape_cast %150 : vector<2x1x128xf32> to vector<2x128xf32>
    %152 = arith.truncf %146 : vector<2x32xf32> to vector<2x32xbf16>
    %cst_35 = arith.constant dense<0.000000e+00> : vector<2x128xf32>
    %153 = tpu.matmul %152, %9, %cst_35 {dimension_numbers = #tpu.dot_dimension_numbers<[1], [0], [0], [1], [0, 0, 1, 1], [], []>} : vector<2x32xbf16>, vector<32x128xbf16>, vector<2x128xf32> -> vector<2x128xf32>
    %154 = arith.addf %151, %153 : vector<2x128xf32>
    %155 = arith.negf %154 : vector<2x128xf32>
    %156 = math.exp %155 : vector<2x128xf32>
    %cst_36 = arith.constant 1.000000e+00 : f32
    %157 = vector.broadcast %cst_36 : f32 to vector<2x128xf32>
    %158 = arith.addf %157, %156 : vector<2x128xf32>
    %159 = arith.divf %157, %158 : vector<2x128xf32>
    %160 = math.tanh %154 : vector<2x128xf32>
    %161 = vector.extract_strided_slice %159 {offsets = [0, 0], sizes = [2, 32], strides = [1, 1]} : vector<2x128xf32> to vector<2x32xf32>
    %162 = vector.extract_strided_slice %159 {offsets = [0, 32], sizes = [2, 32], strides = [1, 1]} : vector<2x128xf32> to vector<2x32xf32>
    %163 = vector.extract_strided_slice %160 {offsets = [0, 64], sizes = [2, 32], strides = [1, 1]} : vector<2x128xf32> to vector<2x32xf32>
    %164 = vector.extract_strided_slice %159 {offsets = [0, 96], sizes = [2, 32], strides = [1, 1]} : vector<2x128xf32> to vector<2x32xf32>
    %165 = arith.mulf %162, %144 : vector<2x32xf32>
    %166 = arith.mulf %161, %163 : vector<2x32xf32>
    %167 = arith.addf %165, %166 : vector<2x32xf32>
    %168 = math.tanh %167 : vector<2x32xf32>
    %169 = arith.mulf %164, %168 : vector<2x32xf32>
    %c0_37 = arith.constant 0 : index
    %c6 = arith.constant 6 : index
    %c0_38 = arith.constant 0 : index
    %170 = vector.load %arg14[%c0_37, %c6, %c0_38] : memref<2x8x32xf32, #tpu.memory_space<vmem>>, vector<2x1x32xf32>
    %171 = vector.shape_cast %170 : vector<2x1x32xf32> to vector<2x32xf32>
    %172 = vector.shape_cast %169 : vector<2x32xf32> to vector<2x1x32xf32>
    tpu.vector_store %arg14[%c0_37, %c6, %c0_38], %172 {strides = array<i32>} : memref<2x8x32xf32, #tpu.memory_space<vmem>>, vector<2x1x32xf32>,
    %173 = vector.extract_strided_slice %8 {offsets = [0, 7, 0], sizes = [2, 1, 128], strides = [1, 1, 1]} : vector<2x8x128xf32> to vector<2x1x128xf32>
    %174 = vector.shape_cast %173 : vector<2x1x128xf32> to vector<2x128xf32>
    %175 = arith.truncf %169 : vector<2x32xf32> to vector<2x32xbf16>
    %cst_39 = arith.constant dense<0.000000e+00> : vector<2x128xf32>
    %176 = tpu.matmul %175, %9, %cst_39 {dimension_numbers = #tpu.dot_dimension_numbers<[1], [0], [0], [1], [0, 0, 1, 1], [], []>} : vector<2x32xbf16>, vector<32x128xbf16>, vector<2x128xf32> -> vector<2x128xf32>
    %177 = arith.addf %174, %176 : vector<2x128xf32>
    %178 = arith.negf %177 : vector<2x128xf32>
    %179 = math.exp %178 : vector<2x128xf32>
    %cst_40 = arith.constant 1.000000e+00 : f32
    %180 = vector.broadcast %cst_40 : f32 to vector<2x128xf32>
    %181 = arith.addf %180, %179 : vector<2x128xf32>
    %182 = arith.divf %180, %181 : vector<2x128xf32>
    %183 = math.tanh %177 : vector<2x128xf32>
    %184 = vector.extract_strided_slice %182 {offsets = [0, 0], sizes = [2, 32], strides = [1, 1]} : vector<2x128xf32> to vector<2x32xf32>
    %185 = vector.extract_strided_slice %182 {offsets = [0, 32], sizes = [2, 32], strides = [1, 1]} : vector<2x128xf32> to vector<2x32xf32>
    %186 = vector.extract_strided_slice %183 {offsets = [0, 64], sizes = [2, 32], strides = [1, 1]} : vector<2x128xf32> to vector<2x32xf32>
    %187 = vector.extract_strided_slice %182 {offsets = [0, 96], sizes = [2, 32], strides = [1, 1]} : vector<2x128xf32> to vector<2x32xf32>
    %188 = arith.mulf %185, %167 : vector<2x32xf32>
    %189 = arith.mulf %184, %186 : vector<2x32xf32>
    %190 = arith.addf %188, %189 : vector<2x32xf32>
    %191 = math.tanh %190 : vector<2x32xf32>
    %192 = arith.mulf %187, %191 : vector<2x32xf32>
    %c0_41 = arith.constant 0 : index
    %c7 = arith.constant 7 : index
    %c0_42 = arith.constant 0 : index
    %193 = vector.load %arg14[%c0_41, %c7, %c0_42] : memref<2x8x32xf32, #tpu.memory_space<vmem>>, vector<2x1x32xf32>
    %194 = vector.shape_cast %193 : vector<2x1x32xf32> to vector<2x32xf32>
    %195 = vector.shape_cast %192 : vector<2x32xf32> to vector<2x1x32xf32>
    tpu.vector_store %arg14[%c0_41, %c7, %c0_42], %195 {strides = array<i32>} : memref<2x8x32xf32, #tpu.memory_space<vmem>>, vector<2x1x32xf32>,
    %c0_43 = arith.constant 0 : index
    %c0_44 = arith.constant 0 : index
    %c0_45 = arith.constant 0 : index
    %196 = vector.load %arg14[%c0_43, %c0_44, %c0_45] : memref<2x8x32xf32, #tpu.memory_space<vmem>>, vector<2x8x32xf32>
    %197 = vector.shape_cast %196 : vector<2x8x32xf32> to vector<16x32xf32>
    %198 = arith.truncf %197 : vector<16x32xf32> to vector<16x32xbf16>
    %c0_46 = arith.constant 0 : index
    %c0_47 = arith.constant 0 : index
    %199 = vector.load %arg4[%c0_46, %c0_47] : memref<32x128xbf16, #tpu.memory_space<vmem>>, vector<32x128xbf16>
    %cst_48 = arith.constant dense<0.000000e+00> : vector<16x128xf32>
    %200 = tpu.matmul %198, %199, %cst_48 {dimension_numbers = #tpu.dot_dimension_numbers<[1], [0], [0], [1], [0, 0, 1, 1], [], []>} : vector<16x32xbf16>, vector<32x128xbf16>, vector<16x128xf32> -> vector<16x128xf32>
    %c0_49 = arith.constant 0 : index
    %c0_50 = arith.constant 0 : index
    %201 = vector.load %arg6[%c0_49, %c0_50] : memref<1x128xf32, #tpu.memory_space<vmem>>, vector<1x128xf32>
    %202 = vector.broadcast %201 : vector<1x128xf32> to vector<16x128xf32>
    %203 = arith.addf %200, %202 : vector<16x128xf32>
    %204 = vector.shape_cast %203 : vector<16x128xf32> to vector<2x8x128xf32>
    %c0_51 = arith.constant 0 : index
    %c0_52 = arith.constant 0 : index
    %205 = vector.load %arg5[%c0_51, %c0_52] : memref<32x128xbf16, #tpu.memory_space<vmem>>, vector<32x128xbf16>
    %cst_53 = arith.constant 0.000000e+00 : f32
    %206 = vector.broadcast %cst_53 : f32 to vector<2x32xf32>
    %cst_54 = arith.constant 0.000000e+00 : f32
    %207 = vector.broadcast %cst_54 : f32 to vector<2x32xf32>
    %208 = vector.extract_strided_slice %204 {offsets = [0, 0, 0], sizes = [2, 1, 128], strides = [1, 1, 1]} : vector<2x8x128xf32> to vector<2x1x128xf32>
    %209 = vector.shape_cast %208 : vector<2x1x128xf32> to vector<2x128xf32>
    %210 = arith.truncf %206 : vector<2x32xf32> to vector<2x32xbf16>
    %cst_55 = arith.constant dense<0.000000e+00> : vector<2x128xf32>
    %211 = tpu.matmul %210, %205, %cst_55 {dimension_numbers = #tpu.dot_dimension_numbers<[1], [0], [0], [1], [0, 0, 1, 1], [], []>} : vector<2x32xbf16>, vector<32x128xbf16>, vector<2x128xf32> -> vector<2x128xf32>
    %212 = arith.addf %209, %211 : vector<2x128xf32>
    %213 = arith.negf %212 : vector<2x128xf32>
    %214 = math.exp %213 : vector<2x128xf32>
    %cst_56 = arith.constant 1.000000e+00 : f32
    %215 = vector.broadcast %cst_56 : f32 to vector<2x128xf32>
    %216 = arith.addf %215, %214 : vector<2x128xf32>
    %217 = arith.divf %215, %216 : vector<2x128xf32>
    %218 = math.tanh %212 : vector<2x128xf32>
    %219 = vector.extract_strided_slice %217 {offsets = [0, 0], sizes = [2, 32], strides = [1, 1]} : vector<2x128xf32> to vector<2x32xf32>
    %220 = vector.extract_strided_slice %217 {offsets = [0, 32], sizes = [2, 32], strides = [1, 1]} : vector<2x128xf32> to vector<2x32xf32>
    %221 = vector.extract_strided_slice %218 {offsets = [0, 64], sizes = [2, 32], strides = [1, 1]} : vector<2x128xf32> to vector<2x32xf32>
    %222 = vector.extract_strided_slice %217 {offsets = [0, 96], sizes = [2, 32], strides = [1, 1]} : vector<2x128xf32> to vector<2x32xf32>
    %223 = arith.mulf %220, %207 : vector<2x32xf32>
    %224 = arith.mulf %219, %221 : vector<2x32xf32>
    %225 = arith.addf %223, %224 : vector<2x32xf32>
    %226 = math.tanh %225 : vector<2x32xf32>
    %227 = arith.mulf %222, %226 : vector<2x32xf32>
    %c0_57 = arith.constant 0 : index
    %c0_58 = arith.constant 0 : index
    %c0_59 = arith.constant 0 : index
    %228 = vector.load %arg15[%c0_57, %c0_58, %c0_59] : memref<2x8x32xf32, #tpu.memory_space<vmem>>, vector<2x1x32xf32>
    %229 = vector.shape_cast %228 : vector<2x1x32xf32> to vector<2x32xf32>
    %230 = vector.shape_cast %227 : vector<2x32xf32> to vector<2x1x32xf32>
    tpu.vector_store %arg15[%c0_57, %c0_58, %c0_59], %230 {strides = array<i32>} : memref<2x8x32xf32, #tpu.memory_space<vmem>>, vector<2x1x32xf32>,
    %231 = vector.extract_strided_slice %204 {offsets = [0, 1, 0], sizes = [2, 1, 128], strides = [1, 1, 1]} : vector<2x8x128xf32> to vector<2x1x128xf32>
    %232 = vector.shape_cast %231 : vector<2x1x128xf32> to vector<2x128xf32>
    %233 = arith.truncf %227 : vector<2x32xf32> to vector<2x32xbf16>
    %cst_60 = arith.constant dense<0.000000e+00> : vector<2x128xf32>
    %234 = tpu.matmul %233, %205, %cst_60 {dimension_numbers = #tpu.dot_dimension_numbers<[1], [0], [0], [1], [0, 0, 1, 1], [], []>} : vector<2x32xbf16>, vector<32x128xbf16>, vector<2x128xf32> -> vector<2x128xf32>
    %235 = arith.addf %232, %234 : vector<2x128xf32>
    %236 = arith.negf %235 : vector<2x128xf32>
    %237 = math.exp %236 : vector<2x128xf32>
    %cst_61 = arith.constant 1.000000e+00 : f32
    %238 = vector.broadcast %cst_61 : f32 to vector<2x128xf32>
    %239 = arith.addf %238, %237 : vector<2x128xf32>
    %240 = arith.divf %238, %239 : vector<2x128xf32>
    %241 = math.tanh %235 : vector<2x128xf32>
    %242 = vector.extract_strided_slice %240 {offsets = [0, 0], sizes = [2, 32], strides = [1, 1]} : vector<2x128xf32> to vector<2x32xf32>
    %243 = vector.extract_strided_slice %240 {offsets = [0, 32], sizes = [2, 32], strides = [1, 1]} : vector<2x128xf32> to vector<2x32xf32>
    %244 = vector.extract_strided_slice %241 {offsets = [0, 64], sizes = [2, 32], strides = [1, 1]} : vector<2x128xf32> to vector<2x32xf32>
    %245 = vector.extract_strided_slice %240 {offsets = [0, 96], sizes = [2, 32], strides = [1, 1]} : vector<2x128xf32> to vector<2x32xf32>
    %246 = arith.mulf %243, %225 : vector<2x32xf32>
    %247 = arith.mulf %242, %244 : vector<2x32xf32>
    %248 = arith.addf %246, %247 : vector<2x32xf32>
    %249 = math.tanh %248 : vector<2x32xf32>
    %250 = arith.mulf %245, %249 : vector<2x32xf32>
    %c0_62 = arith.constant 0 : index
    %c1_63 = arith.constant 1 : index
    %c0_64 = arith.constant 0 : index
    %251 = vector.load %arg15[%c0_62, %c1_63, %c0_64] : memref<2x8x32xf32, #tpu.memory_space<vmem>>, vector<2x1x32xf32>
    %252 = vector.shape_cast %251 : vector<2x1x32xf32> to vector<2x32xf32>
    %253 = vector.shape_cast %250 : vector<2x32xf32> to vector<2x1x32xf32>
    tpu.vector_store %arg15[%c0_62, %c1_63, %c0_64], %253 {strides = array<i32>} : memref<2x8x32xf32, #tpu.memory_space<vmem>>, vector<2x1x32xf32>,
    %254 = vector.extract_strided_slice %204 {offsets = [0, 2, 0], sizes = [2, 1, 128], strides = [1, 1, 1]} : vector<2x8x128xf32> to vector<2x1x128xf32>
    %255 = vector.shape_cast %254 : vector<2x1x128xf32> to vector<2x128xf32>
    %256 = arith.truncf %250 : vector<2x32xf32> to vector<2x32xbf16>
    %cst_65 = arith.constant dense<0.000000e+00> : vector<2x128xf32>
    %257 = tpu.matmul %256, %205, %cst_65 {dimension_numbers = #tpu.dot_dimension_numbers<[1], [0], [0], [1], [0, 0, 1, 1], [], []>} : vector<2x32xbf16>, vector<32x128xbf16>, vector<2x128xf32> -> vector<2x128xf32>
    %258 = arith.addf %255, %257 : vector<2x128xf32>
    %259 = arith.negf %258 : vector<2x128xf32>
    %260 = math.exp %259 : vector<2x128xf32>
    %cst_66 = arith.constant 1.000000e+00 : f32
    %261 = vector.broadcast %cst_66 : f32 to vector<2x128xf32>
    %262 = arith.addf %261, %260 : vector<2x128xf32>
    %263 = arith.divf %261, %262 : vector<2x128xf32>
    %264 = math.tanh %258 : vector<2x128xf32>
    %265 = vector.extract_strided_slice %263 {offsets = [0, 0], sizes = [2, 32], strides = [1, 1]} : vector<2x128xf32> to vector<2x32xf32>
    %266 = vector.extract_strided_slice %263 {offsets = [0, 32], sizes = [2, 32], strides = [1, 1]} : vector<2x128xf32> to vector<2x32xf32>
    %267 = vector.extract_strided_slice %264 {offsets = [0, 64], sizes = [2, 32], strides = [1, 1]} : vector<2x128xf32> to vector<2x32xf32>
    %268 = vector.extract_strided_slice %263 {offsets = [0, 96], sizes = [2, 32], strides = [1, 1]} : vector<2x128xf32> to vector<2x32xf32>
    %269 = arith.mulf %266, %248 : vector<2x32xf32>
    %270 = arith.mulf %265, %267 : vector<2x32xf32>
    %271 = arith.addf %269, %270 : vector<2x32xf32>
    %272 = math.tanh %271 : vector<2x32xf32>
    %273 = arith.mulf %268, %272 : vector<2x32xf32>
    %c0_67 = arith.constant 0 : index
    %c2_68 = arith.constant 2 : index
    %c0_69 = arith.constant 0 : index
    %274 = vector.load %arg15[%c0_67, %c2_68, %c0_69] : memref<2x8x32xf32, #tpu.memory_space<vmem>>, vector<2x1x32xf32>
    %275 = vector.shape_cast %274 : vector<2x1x32xf32> to vector<2x32xf32>
    %276 = vector.shape_cast %273 : vector<2x32xf32> to vector<2x1x32xf32>
    tpu.vector_store %arg15[%c0_67, %c2_68, %c0_69], %276 {strides = array<i32>} : memref<2x8x32xf32, #tpu.memory_space<vmem>>, vector<2x1x32xf32>,
    %277 = vector.extract_strided_slice %204 {offsets = [0, 3, 0], sizes = [2, 1, 128], strides = [1, 1, 1]} : vector<2x8x128xf32> to vector<2x1x128xf32>
    %278 = vector.shape_cast %277 : vector<2x1x128xf32> to vector<2x128xf32>
    %279 = arith.truncf %273 : vector<2x32xf32> to vector<2x32xbf16>
    %cst_70 = arith.constant dense<0.000000e+00> : vector<2x128xf32>
    %280 = tpu.matmul %279, %205, %cst_70 {dimension_numbers = #tpu.dot_dimension_numbers<[1], [0], [0], [1], [0, 0, 1, 1], [], []>} : vector<2x32xbf16>, vector<32x128xbf16>, vector<2x128xf32> -> vector<2x128xf32>
    %281 = arith.addf %278, %280 : vector<2x128xf32>
    %282 = arith.negf %281 : vector<2x128xf32>
    %283 = math.exp %282 : vector<2x128xf32>
    %cst_71 = arith.constant 1.000000e+00 : f32
    %284 = vector.broadcast %cst_71 : f32 to vector<2x128xf32>
    %285 = arith.addf %284, %283 : vector<2x128xf32>
    %286 = arith.divf %284, %285 : vector<2x128xf32>
    %287 = math.tanh %281 : vector<2x128xf32>
    %288 = vector.extract_strided_slice %286 {offsets = [0, 0], sizes = [2, 32], strides = [1, 1]} : vector<2x128xf32> to vector<2x32xf32>
    %289 = vector.extract_strided_slice %286 {offsets = [0, 32], sizes = [2, 32], strides = [1, 1]} : vector<2x128xf32> to vector<2x32xf32>
    %290 = vector.extract_strided_slice %287 {offsets = [0, 64], sizes = [2, 32], strides = [1, 1]} : vector<2x128xf32> to vector<2x32xf32>
    %291 = vector.extract_strided_slice %286 {offsets = [0, 96], sizes = [2, 32], strides = [1, 1]} : vector<2x128xf32> to vector<2x32xf32>
    %292 = arith.mulf %289, %271 : vector<2x32xf32>
    %293 = arith.mulf %288, %290 : vector<2x32xf32>
    %294 = arith.addf %292, %293 : vector<2x32xf32>
    %295 = math.tanh %294 : vector<2x32xf32>
    %296 = arith.mulf %291, %295 : vector<2x32xf32>
    %c0_72 = arith.constant 0 : index
    %c3_73 = arith.constant 3 : index
    %c0_74 = arith.constant 0 : index
    %297 = vector.load %arg15[%c0_72, %c3_73, %c0_74] : memref<2x8x32xf32, #tpu.memory_space<vmem>>, vector<2x1x32xf32>
    %298 = vector.shape_cast %297 : vector<2x1x32xf32> to vector<2x32xf32>
    %299 = vector.shape_cast %296 : vector<2x32xf32> to vector<2x1x32xf32>
    tpu.vector_store %arg15[%c0_72, %c3_73, %c0_74], %299 {strides = array<i32>} : memref<2x8x32xf32, #tpu.memory_space<vmem>>, vector<2x1x32xf32>,
    %300 = vector.extract_strided_slice %204 {offsets = [0, 4, 0], sizes = [2, 1, 128], strides = [1, 1, 1]} : vector<2x8x128xf32> to vector<2x1x128xf32>
    %301 = vector.shape_cast %300 : vector<2x1x128xf32> to vector<2x128xf32>
    %302 = arith.truncf %296 : vector<2x32xf32> to vector<2x32xbf16>
    %cst_75 = arith.constant dense<0.000000e+00> : vector<2x128xf32>
    %303 = tpu.matmul %302, %205, %cst_75 {dimension_numbers = #tpu.dot_dimension_numbers<[1], [0], [0], [1], [0, 0, 1, 1], [], []>} : vector<2x32xbf16>, vector<32x128xbf16>, vector<2x128xf32> -> vector<2x128xf32>
    %304 = arith.addf %301, %303 : vector<2x128xf32>
    %305 = arith.negf %304 : vector<2x128xf32>
    %306 = math.exp %305 : vector<2x128xf32>
    %cst_76 = arith.constant 1.000000e+00 : f32
    %307 = vector.broadcast %cst_76 : f32 to vector<2x128xf32>
    %308 = arith.addf %307, %306 : vector<2x128xf32>
    %309 = arith.divf %307, %308 : vector<2x128xf32>
    %310 = math.tanh %304 : vector<2x128xf32>
    %311 = vector.extract_strided_slice %309 {offsets = [0, 0], sizes = [2, 32], strides = [1, 1]} : vector<2x128xf32> to vector<2x32xf32>
    %312 = vector.extract_strided_slice %309 {offsets = [0, 32], sizes = [2, 32], strides = [1, 1]} : vector<2x128xf32> to vector<2x32xf32>
    %313 = vector.extract_strided_slice %310 {offsets = [0, 64], sizes = [2, 32], strides = [1, 1]} : vector<2x128xf32> to vector<2x32xf32>
    %314 = vector.extract_strided_slice %309 {offsets = [0, 96], sizes = [2, 32], strides = [1, 1]} : vector<2x128xf32> to vector<2x32xf32>
    %315 = arith.mulf %312, %294 : vector<2x32xf32>
    %316 = arith.mulf %311, %313 : vector<2x32xf32>
    %317 = arith.addf %315, %316 : vector<2x32xf32>
    %318 = math.tanh %317 : vector<2x32xf32>
    %319 = arith.mulf %314, %318 : vector<2x32xf32>
    %c0_77 = arith.constant 0 : index
    %c4_78 = arith.constant 4 : index
    %c0_79 = arith.constant 0 : index
    %320 = vector.load %arg15[%c0_77, %c4_78, %c0_79] : memref<2x8x32xf32, #tpu.memory_space<vmem>>, vector<2x1x32xf32>
    %321 = vector.shape_cast %320 : vector<2x1x32xf32> to vector<2x32xf32>
    %322 = vector.shape_cast %319 : vector<2x32xf32> to vector<2x1x32xf32>
    tpu.vector_store %arg15[%c0_77, %c4_78, %c0_79], %322 {strides = array<i32>} : memref<2x8x32xf32, #tpu.memory_space<vmem>>, vector<2x1x32xf32>,
    %323 = vector.extract_strided_slice %204 {offsets = [0, 5, 0], sizes = [2, 1, 128], strides = [1, 1, 1]} : vector<2x8x128xf32> to vector<2x1x128xf32>
    %324 = vector.shape_cast %323 : vector<2x1x128xf32> to vector<2x128xf32>
    %325 = arith.truncf %319 : vector<2x32xf32> to vector<2x32xbf16>
    %cst_80 = arith.constant dense<0.000000e+00> : vector<2x128xf32>
    %326 = tpu.matmul %325, %205, %cst_80 {dimension_numbers = #tpu.dot_dimension_numbers<[1], [0], [0], [1], [0, 0, 1, 1], [], []>} : vector<2x32xbf16>, vector<32x128xbf16>, vector<2x128xf32> -> vector<2x128xf32>
    %327 = arith.addf %324, %326 : vector<2x128xf32>
    %328 = arith.negf %327 : vector<2x128xf32>
    %329 = math.exp %328 : vector<2x128xf32>
    %cst_81 = arith.constant 1.000000e+00 : f32
    %330 = vector.broadcast %cst_81 : f32 to vector<2x128xf32>
    %331 = arith.addf %330, %329 : vector<2x128xf32>
    %332 = arith.divf %330, %331 : vector<2x128xf32>
    %333 = math.tanh %327 : vector<2x128xf32>
    %334 = vector.extract_strided_slice %332 {offsets = [0, 0], sizes = [2, 32], strides = [1, 1]} : vector<2x128xf32> to vector<2x32xf32>
    %335 = vector.extract_strided_slice %332 {offsets = [0, 32], sizes = [2, 32], strides = [1, 1]} : vector<2x128xf32> to vector<2x32xf32>
    %336 = vector.extract_strided_slice %333 {offsets = [0, 64], sizes = [2, 32], strides = [1, 1]} : vector<2x128xf32> to vector<2x32xf32>
    %337 = vector.extract_strided_slice %332 {offsets = [0, 96], sizes = [2, 32], strides = [1, 1]} : vector<2x128xf32> to vector<2x32xf32>
    %338 = arith.mulf %335, %317 : vector<2x32xf32>
    %339 = arith.mulf %334, %336 : vector<2x32xf32>
    %340 = arith.addf %338, %339 : vector<2x32xf32>
    %341 = math.tanh %340 : vector<2x32xf32>
    %342 = arith.mulf %337, %341 : vector<2x32xf32>
    %c0_82 = arith.constant 0 : index
    %c5_83 = arith.constant 5 : index
    %c0_84 = arith.constant 0 : index
    %343 = vector.load %arg15[%c0_82, %c5_83, %c0_84] : memref<2x8x32xf32, #tpu.memory_space<vmem>>, vector<2x1x32xf32>
    %344 = vector.shape_cast %343 : vector<2x1x32xf32> to vector<2x32xf32>
    %345 = vector.shape_cast %342 : vector<2x32xf32> to vector<2x1x32xf32>
    tpu.vector_store %arg15[%c0_82, %c5_83, %c0_84], %345 {strides = array<i32>} : memref<2x8x32xf32, #tpu.memory_space<vmem>>, vector<2x1x32xf32>,
    %346 = vector.extract_strided_slice %204 {offsets = [0, 6, 0], sizes = [2, 1, 128], strides = [1, 1, 1]} : vector<2x8x128xf32> to vector<2x1x128xf32>
    %347 = vector.shape_cast %346 : vector<2x1x128xf32> to vector<2x128xf32>
    %348 = arith.truncf %342 : vector<2x32xf32> to vector<2x32xbf16>
    %cst_85 = arith.constant dense<0.000000e+00> : vector<2x128xf32>
    %349 = tpu.matmul %348, %205, %cst_85 {dimension_numbers = #tpu.dot_dimension_numbers<[1], [0], [0], [1], [0, 0, 1, 1], [], []>} : vector<2x32xbf16>, vector<32x128xbf16>, vector<2x128xf32> -> vector<2x128xf32>
    %350 = arith.addf %347, %349 : vector<2x128xf32>
    %351 = arith.negf %350 : vector<2x128xf32>
    %352 = math.exp %351 : vector<2x128xf32>
    %cst_86 = arith.constant 1.000000e+00 : f32
    %353 = vector.broadcast %cst_86 : f32 to vector<2x128xf32>
    %354 = arith.addf %353, %352 : vector<2x128xf32>
    %355 = arith.divf %353, %354 : vector<2x128xf32>
    %356 = math.tanh %350 : vector<2x128xf32>
    %357 = vector.extract_strided_slice %355 {offsets = [0, 0], sizes = [2, 32], strides = [1, 1]} : vector<2x128xf32> to vector<2x32xf32>
    %358 = vector.extract_strided_slice %355 {offsets = [0, 32], sizes = [2, 32], strides = [1, 1]} : vector<2x128xf32> to vector<2x32xf32>
    %359 = vector.extract_strided_slice %356 {offsets = [0, 64], sizes = [2, 32], strides = [1, 1]} : vector<2x128xf32> to vector<2x32xf32>
    %360 = vector.extract_strided_slice %355 {offsets = [0, 96], sizes = [2, 32], strides = [1, 1]} : vector<2x128xf32> to vector<2x32xf32>
    %361 = arith.mulf %358, %340 : vector<2x32xf32>
    %362 = arith.mulf %357, %359 : vector<2x32xf32>
    %363 = arith.addf %361, %362 : vector<2x32xf32>
    %364 = math.tanh %363 : vector<2x32xf32>
    %365 = arith.mulf %360, %364 : vector<2x32xf32>
    %c0_87 = arith.constant 0 : index
    %c6_88 = arith.constant 6 : index
    %c0_89 = arith.constant 0 : index
    %366 = vector.load %arg15[%c0_87, %c6_88, %c0_89] : memref<2x8x32xf32, #tpu.memory_space<vmem>>, vector<2x1x32xf32>
    %367 = vector.shape_cast %366 : vector<2x1x32xf32> to vector<2x32xf32>
    %368 = vector.shape_cast %365 : vector<2x32xf32> to vector<2x1x32xf32>
    tpu.vector_store %arg15[%c0_87, %c6_88, %c0_89], %368 {strides = array<i32>} : memref<2x8x32xf32, #tpu.memory_space<vmem>>, vector<2x1x32xf32>,
    %369 = vector.extract_strided_slice %204 {offsets = [0, 7, 0], sizes = [2, 1, 128], strides = [1, 1, 1]} : vector<2x8x128xf32> to vector<2x1x128xf32>
    %370 = vector.shape_cast %369 : vector<2x1x128xf32> to vector<2x128xf32>
    %371 = arith.truncf %365 : vector<2x32xf32> to vector<2x32xbf16>
    %cst_90 = arith.constant dense<0.000000e+00> : vector<2x128xf32>
    %372 = tpu.matmul %371, %205, %cst_90 {dimension_numbers = #tpu.dot_dimension_numbers<[1], [0], [0], [1], [0, 0, 1, 1], [], []>} : vector<2x32xbf16>, vector<32x128xbf16>, vector<2x128xf32> -> vector<2x128xf32>
    %373 = arith.addf %370, %372 : vector<2x128xf32>
    %374 = arith.negf %373 : vector<2x128xf32>
    %375 = math.exp %374 : vector<2x128xf32>
    %cst_91 = arith.constant 1.000000e+00 : f32
    %376 = vector.broadcast %cst_91 : f32 to vector<2x128xf32>
    %377 = arith.addf %376, %375 : vector<2x128xf32>
    %378 = arith.divf %376, %377 : vector<2x128xf32>
    %379 = math.tanh %373 : vector<2x128xf32>
    %380 = vector.extract_strided_slice %378 {offsets = [0, 0], sizes = [2, 32], strides = [1, 1]} : vector<2x128xf32> to vector<2x32xf32>
    %381 = vector.extract_strided_slice %378 {offsets = [0, 32], sizes = [2, 32], strides = [1, 1]} : vector<2x128xf32> to vector<2x32xf32>
    %382 = vector.extract_strided_slice %379 {offsets = [0, 64], sizes = [2, 32], strides = [1, 1]} : vector<2x128xf32> to vector<2x32xf32>
    %383 = vector.extract_strided_slice %378 {offsets = [0, 96], sizes = [2, 32], strides = [1, 1]} : vector<2x128xf32> to vector<2x32xf32>
    %384 = arith.mulf %381, %363 : vector<2x32xf32>
    %385 = arith.mulf %380, %382 : vector<2x32xf32>
    %386 = arith.addf %384, %385 : vector<2x32xf32>
    %387 = math.tanh %386 : vector<2x32xf32>
    %388 = arith.mulf %383, %387 : vector<2x32xf32>
    %c0_92 = arith.constant 0 : index
    %c7_93 = arith.constant 7 : index
    %c0_94 = arith.constant 0 : index
    %389 = vector.load %arg15[%c0_92, %c7_93, %c0_94] : memref<2x8x32xf32, #tpu.memory_space<vmem>>, vector<2x1x32xf32>
    %390 = vector.shape_cast %389 : vector<2x1x32xf32> to vector<2x32xf32>
    %391 = vector.shape_cast %388 : vector<2x32xf32> to vector<2x1x32xf32>
    tpu.vector_store %arg15[%c0_92, %c7_93, %c0_94], %391 {strides = array<i32>} : memref<2x8x32xf32, #tpu.memory_space<vmem>>, vector<2x1x32xf32>,
    %c0_95 = arith.constant 0 : index
    %c0_96 = arith.constant 0 : index
    %c0_97 = arith.constant 0 : index
    %392 = vector.load %arg15[%c0_95, %c0_96, %c0_97] : memref<2x8x32xf32, #tpu.memory_space<vmem>>, vector<2x8x32xf32>
    %393 = vector.shape_cast %392 : vector<2x8x32xf32> to vector<16x32xf32>
    %394 = arith.truncf %393 : vector<16x32xf32> to vector<16x32xbf16>
    %c0_98 = arith.constant 0 : index
    %c0_99 = arith.constant 0 : index
    %395 = vector.load %arg7[%c0_98, %c0_99] : memref<32x32xbf16, #tpu.memory_space<vmem>>, vector<32x32xbf16>
    %cst_100 = arith.constant dense<0.000000e+00> : vector<16x32xf32>
    %396 = tpu.matmul %394, %395, %cst_100 {dimension_numbers = #tpu.dot_dimension_numbers<[1], [0], [0], [1], [0, 0, 1, 1], [], []>} : vector<16x32xbf16>, vector<32x32xbf16>, vector<16x32xf32> -> vector<16x32xf32>
    %c0_101 = arith.constant 0 : index
    %c0_102 = arith.constant 0 : index
    %397 = vector.load %arg8[%c0_101, %c0_102] : memref<1x32xf32, #tpu.memory_space<vmem>>, vector<1x32xf32>
    %398 = vector.broadcast %397 : vector<1x32xf32> to vector<16x32xf32>
    %399 = arith.addf %396, %398 : vector<16x32xf32>
    %400 = math.tanh %399 : vector<16x32xf32>
    %401 = vector.shape_cast %400 : vector<16x32xf32> to vector<2x8x32xf32>
    %c0_103 = arith.constant 0 : index
    %c0_104 = arith.constant 0 : index
    %402 = vector.load %arg9[%c0_103, %c0_104] : memref<1x32xf32, #tpu.memory_space<vmem>>, vector<1x32xf32>
    %403 = vector.shape_cast %402 : vector<1x32xf32> to vector<1x1x32xf32>
    %404 = vector.broadcast %403 : vector<1x1x32xf32> to vector<2x8x32xf32>
    %405 = arith.mulf %401, %404 : vector<2x8x32xf32>
    %cst_105 = arith.constant dense<0.000000e+00> : vector<2x8xf32>
    %406 = vector.multi_reduction <add>, %405, %cst_105 [2] : vector<2x8x32xf32> to vector<2x8xf32>
    %407 = vector.shape_cast %406 : vector<2x8xf32> to vector<2x8x1xf32>
    %cst_106 = arith.constant dense<0xFF800000> : vector<2x1xf32>
    %408 = vector.multi_reduction <maximumf>, %407, %cst_106 [1] : vector<2x8x1xf32> to vector<2x1xf32>
    %409 = vector.shape_cast %408 : vector<2x1xf32> to vector<2x1x1xf32>
    %410 = vector.broadcast %409 : vector<2x1x1xf32> to vector<2x8x1xf32>
    %411 = arith.subf %407, %410 : vector<2x8x1xf32>
    %412 = math.exp %411 : vector<2x8x1xf32>
    %cst_107 = arith.constant dense<0.000000e+00> : vector<2x1xf32>
    %413 = vector.multi_reduction <add>, %412, %cst_107 [1] : vector<2x8x1xf32> to vector<2x1xf32>
    %414 = vector.shape_cast %413 : vector<2x1xf32> to vector<2x1x1xf32>
    %415 = vector.broadcast %414 : vector<2x1x1xf32> to vector<2x8x1xf32>
    %416 = arith.divf %412, %415 : vector<2x8x1xf32>
    %417 = vector.extract_strided_slice %416 {offsets = [0, 0, 0], sizes = [2, 1, 1], strides = [1, 1, 1]} : vector<2x8x1xf32> to vector<2x1x1xf32>
    %418 = vector.shape_cast %417 : vector<2x1x1xf32> to vector<2x1xf32>
    %419 = vector.extract_strided_slice %416 {offsets = [0, 1, 0], sizes = [2, 1, 1], strides = [1, 1, 1]} : vector<2x8x1xf32> to vector<2x1x1xf32>
    %420 = vector.shape_cast %419 : vector<2x1x1xf32> to vector<2x1xf32>
    %421 = vector.extract_strided_slice %416 {offsets = [0, 2, 0], sizes = [2, 1, 1], strides = [1, 1, 1]} : vector<2x8x1xf32> to vector<2x1x1xf32>
    %422 = vector.shape_cast %421 : vector<2x1x1xf32> to vector<2x1xf32>
    %423 = vector.extract_strided_slice %416 {offsets = [0, 3, 0], sizes = [2, 1, 1], strides = [1, 1, 1]} : vector<2x8x1xf32> to vector<2x1x1xf32>
    %424 = vector.shape_cast %423 : vector<2x1x1xf32> to vector<2x1xf32>
    %425 = vector.extract_strided_slice %416 {offsets = [0, 4, 0], sizes = [2, 1, 1], strides = [1, 1, 1]} : vector<2x8x1xf32> to vector<2x1x1xf32>
    %426 = vector.shape_cast %425 : vector<2x1x1xf32> to vector<2x1xf32>
    %427 = vector.extract_strided_slice %416 {offsets = [0, 5, 0], sizes = [2, 1, 1], strides = [1, 1, 1]} : vector<2x8x1xf32> to vector<2x1x1xf32>
    %428 = vector.shape_cast %427 : vector<2x1x1xf32> to vector<2x1xf32>
    %429 = vector.extract_strided_slice %416 {offsets = [0, 6, 0], sizes = [2, 1, 1], strides = [1, 1, 1]} : vector<2x8x1xf32> to vector<2x1x1xf32>
    %430 = vector.shape_cast %429 : vector<2x1x1xf32> to vector<2x1xf32>
    %431 = vector.extract_strided_slice %416 {offsets = [0, 7, 0], sizes = [2, 1, 1], strides = [1, 1, 1]} : vector<2x8x1xf32> to vector<2x1x1xf32>
    %432 = vector.shape_cast %431 : vector<2x1x1xf32> to vector<2x1xf32>
    %433 = tpu.concatenate %418, %420, %422, %424, %426, %428, %430, %432 in 1 : vector<2x1xf32>, vector<2x1xf32>, vector<2x1xf32>, vector<2x1xf32>, vector<2x1xf32>, vector<2x1xf32>, vector<2x1xf32>, vector<2x1xf32> -> vector<2x8xf32>
    %c0_108 = arith.constant 0 : index
    %c0_109 = arith.constant 0 : index
    %434 = vector.load %arg13[%c0_108, %c0_109] : memref<2x8xf32, #tpu.memory_space<vmem>>, vector<2x8xf32>
    tpu.vector_store %arg13[%c0_108, %c0_109], %433 {strides = array<i32>} : memref<2x8xf32, #tpu.memory_space<vmem>>, vector<2x8xf32>,
    %435 = vector.shape_cast %393 : vector<16x32xf32> to vector<2x8x32xf32>
    %436 = vector.broadcast %416 : vector<2x8x1xf32> to vector<2x8x32xf32>
    %437 = arith.mulf %436, %435 : vector<2x8x32xf32>
    %cst_110 = arith.constant dense<0.000000e+00> : vector<2x32xf32>
    %438 = vector.multi_reduction <add>, %437, %cst_110 [1] : vector<2x8x32xf32> to vector<2x32xf32>
    %439 = arith.truncf %438 : vector<2x32xf32> to vector<2x32xbf16>
    %c0_111 = arith.constant 0 : index
    %c0_112 = arith.constant 0 : index
    %440 = vector.load %arg10[%c0_111, %c0_112] : memref<32x24xbf16, #tpu.memory_space<vmem>>, vector<32x24xbf16>
    %cst_113 = arith.constant dense<0.000000e+00> : vector<2x24xf32>
    %441 = tpu.matmul %439, %440, %cst_113 {dimension_numbers = #tpu.dot_dimension_numbers<[1], [0], [0], [1], [0, 0, 1, 1], [], []>} : vector<2x32xbf16>, vector<32x24xbf16>, vector<2x24xf32> -> vector<2x24xf32>
    %c0_114 = arith.constant 0 : index
    %c0_115 = arith.constant 0 : index
    %442 = vector.load %arg11[%c0_114, %c0_115] : memref<1x24xf32, #tpu.memory_space<vmem>>, vector<1x24xf32>
    %443 = vector.broadcast %442 : vector<1x24xf32> to vector<2x24xf32>
    %444 = arith.addf %441, %443 : vector<2x24xf32>
    %c0_116 = arith.constant 0 : index
    %c0_117 = arith.constant 0 : index
    %445 = vector.load %arg12[%c0_116, %c0_117] : memref<2x24xf32, #tpu.memory_space<vmem>>, vector<2x24xf32>
    tpu.vector_store %arg12[%c0_116, %c0_117], %444 {strides = array<i32>} : memref<2x24xf32, #tpu.memory_space<vmem>>, vector<2x24xf32>,
    return
  }
}

</mosaic_0001>

<llo_original>
// kernel: tpu_custom_call.1
$region0: #{tpu_custom_call.1}
  #allocation0 [shape = 'u32[]', space=smem, size = 0x4, offset = 0x4, fixed_abs, tag = 'smem constant byte address 0x4 - core index']
  #allocation1 [shape = 'u32[144,128]{1,0:T(1,128)}', space=vmem, size = 0x12000, scoped, tag = 'internal scratch']
  #allocation2 [shape = 'f32[2,8,32]{2,1,0:T(8,128)}', space=vmem, size = 0x2000, scoped, tag = 'scratch operand']
  #allocation3 [shape = 'f32[2,8,32]{2,1,0:T(8,128)}', space=vmem, size = 0x2000, scoped, tag = 'scratch operand']
  %s0 = inlined_call_operand.vmem [shape: f32[2,8,4], index: 0, kind: input, shape index: {}]
  %s1 = inlined_call_operand.vmem [shape: bf16[4,128], index: 1, kind: input, shape index: {}]
  %s2 = inlined_call_operand.vmem [shape: bf16[32,128], index: 2, kind: input, shape index: {}]
  %s3 = inlined_call_operand.hbm [shape: f32[1,128], index: 3, kind: input, shape index: {}]
  %s4 = inlined_call_operand.vmem [shape: bf16[32,128], index: 4, kind: input, shape index: {}]
  %s5 = inlined_call_operand.vmem [shape: bf16[32,128], index: 5, kind: input, shape index: {}]
  %s6 = inlined_call_operand.hbm [shape: f32[1,128], index: 6, kind: input, shape index: {}]
  %s7 = inlined_call_operand.vmem [shape: bf16[32,32], index: 7, kind: input, shape index: {}]
  %s8 = inlined_call_operand.vmem [shape: f32[1,32], index: 8, kind: input, shape index: {}]
  %s9 = inlined_call_operand.vmem [shape: f32[1,32], index: 9, kind: input, shape index: {}]
  %s10 = inlined_call_operand.vmem [shape: bf16[32,24], index: 10, kind: input, shape index: {}]
  %s11 = inlined_call_operand.vmem [shape: f32[1,24], index: 11, kind: input, shape index: {}]
  %s12 = inlined_call_operand.hbm [shape: f32[2,24], index: 12, kind: output, shape index: {0}]
  %s13 = inlined_call_operand.hbm [shape: f32[2,8], index: 13, kind: output, shape index: {1}]
  %14 = xla_tuple %s12, %s13
  %s15 = sld [smem:[#allocation0]]
  $region74: #{tpu_custom_call.1} parent=0
    _
  %s17 = ssub.s32 1, %s15
  %s18 = scalar_select 0, %s17, %s15
  $region1: #{tpu_custom_call.1} parent=0
    #allocation4 [shape = 'u8[512]{0}', space=vmem, size = 0x400, scoped, tag = 'input window, operand 3, single buffered']
    #allocation5 [shape = 's32[1]{0}', space=sflag, size = 0x4, scoped, tag = 'scoped memory for tpu_custom_call.1']
    #allocation6 [shape = 's32[1]{0}', space=sflag, size = 0x4, scoped, tag = 'scoped memory for tpu_custom_call.1']
    #allocation7 [shape = 'u8[512]{0}', space=vmem, size = 0x400, scoped, tag = 'input window, operand 6, single buffered']
    #allocation8 [shape = 's32[1]{0}', space=sflag, size = 0x4, scoped, tag = 'scoped memory for tpu_custom_call.1']
    #allocation9 [shape = 'u8[1024]{0}', space=vmem, size = 0x400, scoped, tag = 'output window, operand 0, single buffered']
    #allocation10 [shape = 'u8[1024]{0}', space=vmem, size = 0x400, scoped, tag = 'output window, operand 1, single buffered']
    #allocation11 [shape = 's32[1]{0}', space=sflag, size = 0x4, scoped, tag = 'scoped memory for tpu_custom_call.1']
    %19 = vsyncpa [#allocation5], 0
    %20 = vsyncpa [#allocation8], 0
    %21 = vsyncpa [#allocation6], 0
    %22 = vsyncpa [#allocation11], 0
    // Predicated region
    $region2: #{tpu_custom_call.1} parent=1 // pred_check
      _
    $region3: #{tpu_custom_call.1} parent=1 // pred_check_branch
      %24 = sbr.rel (0) target = $region5
    $region4: #{tpu_custom_call.1} parent=1 // pred_region
      _
    $region5: #{tpu_custom_call.1} parent=1 // pred_fallthru
      _
    // Predicated region
    $region6: #{tpu_custom_call.1} parent=1 // pred_check
      _
    $region7: #{tpu_custom_call.1} parent=1 // pred_check_branch
      %26 = sbr.rel (0) target = $region9
    $region8: #{tpu_custom_call.1} parent=1 // pred_region
      _
    $region9: #{tpu_custom_call.1} parent=1 // pred_fallthru
      _
    // Predicated region
    $region10: #{tpu_custom_call.1} parent=1 // pred_check
      _
    $region11: #{tpu_custom_call.1} parent=1 // pred_check_branch
      %28 = sbr.rel (0) target = $region13
    $region12: #{tpu_custom_call.1} parent=1 // pred_region
      _
    $region13: #{tpu_custom_call.1} parent=1 // pred_fallthru
      _
    // Predicated region
    $region14: #{tpu_custom_call.1} parent=1 // pred_check
      _
    $region15: #{tpu_custom_call.1} parent=1 // pred_check_branch
      %30 = sbr.rel (0) target = $region17
    $region16: #{tpu_custom_call.1} parent=1 // pred_region
      %s32 = ssub.s32 16, 16
      %33 = vsyncadd [#allocation5], %s32
      %s35 = sshll.u32 [#allocation4], 4
      %s36 = int_to_ptr.vmem [resolvable:$true] %s35
      %38 = dma.hbm_to_vmem [thread:$0]  %s3, 16, %s36, [#allocation5]
    $region17: #{tpu_custom_call.1} parent=1 // pred_fallthru
      _
    // Predicated region
    $region18: #{tpu_custom_call.1} parent=1 // pred_check
      _
    $region19: #{tpu_custom_call.1} parent=1 // pred_check_branch
      %40 = sbr.rel (0) target = $region21
    $region20: #{tpu_custom_call.1} parent=1 // pred_region
      _
    $region21: #{tpu_custom_call.1} parent=1 // pred_fallthru
      _
    // Predicated region
    $region22: #{tpu_custom_call.1} parent=1 // pred_check
      _
    $region23: #{tpu_custom_call.1} parent=1 // pred_check_branch
      %42 = sbr.rel (0) target = $region25
    $region24: #{tpu_custom_call.1} parent=1 // pred_region
      _
    $region25: #{tpu_custom_call.1} parent=1 // pred_fallthru
      _
    // Predicated region
    $region26: #{tpu_custom_call.1} parent=1 // pred_check
      _
    $region27: #{tpu_custom_call.1} parent=1 // pred_check_branch
      %44 = sbr.rel (0) target = $region29
    $region28: #{tpu_custom_call.1} parent=1 // pred_region
      %s46 = ssub.s32 16, 16
      %47 = vsyncadd [#allocation8], %s46
      %s49 = sshll.u32 [#allocation7], 4
      %s50 = int_to_ptr.vmem [resolvable:$true] %s49
      %52 = dma.hbm_to_vmem [thread:$0]  %s6, 16, %s50, [#allocation8]
    $region29: #{tpu_custom_call.1} parent=1 // pred_fallthru
      _
    // Predicated region
    $region30: #{tpu_custom_call.1} parent=1 // pred_check
      _
    $region31: #{tpu_custom_call.1} parent=1 // pred_check_branch
      %54 = sbr.rel (0) target = $region33
    $region32: #{tpu_custom_call.1} parent=1 // pred_region
      _
    $region33: #{tpu_custom_call.1} parent=1 // pred_fallthru
      _
    // Predicated region
    $region34: #{tpu_custom_call.1} parent=1 // pred_check
      _
    $region35: #{tpu_custom_call.1} parent=1 // pred_check_branch
      %56 = sbr.rel (0) target = $region37
    $region36: #{tpu_custom_call.1} parent=1 // pred_region
      _
    $region37: #{tpu_custom_call.1} parent=1 // pred_fallthru
      _
    // Predicated region
    $region38: #{tpu_custom_call.1} parent=1 // pred_check
      _
    $region39: #{tpu_custom_call.1} parent=1 // pred_check_branch
      %58 = sbr.rel (0) target = $region41
    $region40: #{tpu_custom_call.1} parent=1 // pred_region
      _
    $region41: #{tpu_custom_call.1} parent=1 // pred_fallthru
      _
    // Predicated region
    $region42: #{tpu_custom_call.1} parent=1 // pred_check
      _
    $region43: #{tpu_custom_call.1} parent=1 // pred_check_branch
      %60 = sbr.rel (0) target = $region45
    $region44: #{tpu_custom_call.1} parent=1 // pred_region
      _
    $region45: #{tpu_custom_call.1} parent=1 // pred_fallthru
      _
    // Predicated region
    $region46: #{tpu_custom_call.1} parent=1 // pred_check
      _
    $region47: #{tpu_custom_call.1} parent=1 // pred_check_branch
      %62 = sbr.rel (0) target = $region49
    $region48: #{tpu_custom_call.1} parent=1 // pred_region
      _
    $region49: #{tpu_custom_call.1} parent=1 // pred_fallthru
      _
    // Predicated region
    $region50: #{tpu_custom_call.1} parent=1 // pred_check
      _
    $region51: #{tpu_custom_call.1} parent=1 // pred_check_branch
      %64 = sbr.rel (0) target = $region53
    $region52: #{tpu_custom_call.1} parent=1 // pred_region
      %65 = dma.done [#allocation5], 16
    $region53: #{tpu_custom_call.1} parent=1 // pred_fallthru
      _
    // Predicated region
    $region54: #{tpu_custom_call.1} parent=1 // pred_check
      _
    $region55: #{tpu_custom_call.1} parent=1 // pred_check_branch
      %67 = sbr.rel (0) target = $region57
    $region56: #{tpu_custom_call.1} parent=1 // pred_region
      %68 = dma.done [#allocation8], 16
    $region57: #{tpu_custom_call.1} parent=1 // pred_fallthru
      _
    %v70 = vld [vmem:[%s0] sm:$0xff]
    %v71 = vld [vmem:[%s0 + $0x8] sm:$0xff]
    %v72 = vpack.c.bf16 %v71, %v70
    %v73 = vld [vmem:[%s1] sm:$0x3]
    %v74 = vld [vmem:[#allocation4] sm:$0x1]
    %v76 = vlaneseq
    %v77 = vshrl.u32 %v76, 7
    %v78 = vsub.s32 0, %v77
    %v79 = vrot.slane %v74, %v78
    %vm81 = vcmask 31744
    %v83 = vsel %vm81, %v72, 0
    %vm85 = vcmask 1041408
    %v87 = vsel %vm85, %v73, 0
    %89 = vmatprep.subr.bf16.mxu0 0
    %90 = vmatpush1.bf16.msra.mxu0 %v87
    %91 = vmatprep.subr.bf16.mxu0 0
    %92 = vmatpush1.bf16.msra.mxu0 0
    %93 = vmatprep.subr.bf16.mxu0 0
    %94 = vmatpush1.bf16.msra.mxu0 0
    %95 = vmatprep.subr.bf16.mxu0 0
    %96 = vmatpush1.bf16.msra.mxu0 0
    %97 = vmatprep.subr.bf16.mxu0 0
    %98 = vmatpush1.bf16.msra.mxu0 0
    %99 = vmatprep.subr.bf16.mxu0 0
    %100 = vmatpush1.bf16.msra.mxu0 0
    %101 = vmatprep.subr.bf16.mxu0 0
    %102 = vmatpush1.bf16.msra.mxu0 0
    %103 = vmatprep.subr.bf16.mxu0 0
    %104 = vmatpush1.bf16.msra.mxu0 0
    %105 = vmatprep.subr.bf16.mxu0 0
    %106 = vmatpush1.bf16.msra.mxu0 0
    %107 = vmatprep.subr.bf16.mxu0 0
    %108 = vmatpush1.bf16.msra.mxu0 0
    %109 = vmatprep.subr.bf16.mxu0 0
    %110 = vmatpush1.bf16.msra.mxu0 0
    %111 = vmatprep.subr.bf16.mxu0 0
    %112 = vmatpush1.bf16.msra.mxu0 0
    %113 = vmatprep.subr.bf16.mxu0 0
    %114 = vmatpush1.bf16.msra.mxu0 0
    %115 = vmatprep.subr.bf16.mxu0 0
    %116 = vmatpush1.bf16.msra.mxu0 0
    %117 = vmatprep.subr.bf16.mxu0 0
    %118 = vmatpush1.bf16.msra.mxu0 0
    %119 = vmatprep.subr.bf16.mxu0 0
    %120 = vmatpush1.bf16.msra.mxu0 0
    %121 = vmatprep.mubr.bf16.mxu0 0
    %122 = vmatmul.mubr.bf16.gmra.mrb[0].mxu0 %v83
    %v123 = vpop.f32.mrb[0].mxu0
    %v124 = vadd.f32 %v79, %v123
    %v125 = vpop.f32.mrb[0].mxu0
    %v126 = vpop.f32.mrb[0].mxu0
    %v127 = vadd.f32 %v79, %v126
    %v128 = vpop.f32.mrb[0].mxu0
    %129 = vdwg.mxu0
    %v130 = vld [vmem:[%s2] sm:$0xf]
    %v131 = vld [vmem:[%s2 + $0x4] sm:$0xf]
    %v132 = vld [vmem:[%s2 + $0x8] sm:$0xf]
    %v133 = vld [vmem:[%s2 + $0xc] sm:$0xf]
    %v138 = vunpack.c.l.b16 %v130
    %v139 = vunpack.c.l.b16 %v131
    %v140 = vunpack.c.l.b16 %v132
    %v141 = vunpack.c.l.b16 %v133
    %v142 = vpack.c.b16 %v139, %v138
    %v143 = vpack.c.b16 %v141, %v140
    %vm146 = vcmask 261120
    %v148 = vsel %vm146, 0, 0
    %150 = vmatprep.subr.bf16.mxu0 0
    %151 = vmatpush1.bf16.msra.mxu0 %v142
    %152 = vmatprep.subr.bf16.mxu0 0
    %153 = vmatpush1.bf16.msra.mxu0 %v143
    %154 = vmatprep.subr.bf16.mxu0 0
    %155 = vmatpush1.bf16.msra.mxu0 0
    %156 = vmatprep.subr.bf16.mxu0 0
    %157 = vmatpush1.bf16.msra.mxu0 0
    %158 = vmatprep.subr.bf16.mxu0 0
    %159 = vmatpush1.bf16.msra.mxu0 0
    %160 = vmatprep.subr.bf16.mxu0 0
    %161 = vmatpush1.bf16.msra.mxu0 0
    %162 = vmatprep.subr.bf16.mxu0 0
    %163 = vmatpush1.bf16.msra.mxu0 0
    %164 = vmatprep.subr.bf16.mxu0 0
    %165 = vmatpush1.bf16.msra.mxu0 0
    %166 = vmatprep.subr.bf16.mxu0 0
    %167 = vmatpush1.bf16.msra.mxu0 0
    %168 = vmatprep.subr.bf16.mxu0 0
    %169 = vmatpush1.bf16.msra.mxu0 0
    %170 = vmatprep.subr.bf16.mxu0 0
    %171 = vmatpush1.bf16.msra.mxu0 0
    %172 = vmatprep.subr.bf16.mxu0 0
    %173 = vmatpush1.bf16.msra.mxu0 0
    %174 = vmatprep.subr.bf16.mxu0 0
    %175 = vmatpush1.bf16.msra.mxu0 0
    %176 = vmatprep.subr.bf16.mxu0 0
    %177 = vmatpush1.bf16.msra.mxu0 0
    %178 = vmatprep.subr.bf16.mxu0 0
    %179 = vmatpush1.bf16.msra.mxu0 0
    %180 = vmatprep.subr.bf16.mxu0 0
    %181 = vmatpush1.bf16.msra.mxu0 0
    %182 = vmatprep.mubr.bf16.mxu0 0
    %183 = vmatmul.mubr.bf16.gmra.mrb[0].mxu0 %v148
    %v184 = vpop.f32.mrb[0].mxu0
    %v185 = vadd.f32 0.0, %v184
    %v186 = vpop.f32.mrb[0].mxu0
    %v187 = vpop.f32.mrb[0].mxu0
    %v188 = vpop.f32.mrb[0].mxu0
    %189 = vdwg.mxu0
    %v191 = vrot.slane %v185, 1
    %v194 = vadd.f32 %v124, %v185
    %v195 = vadd.f32 %v127, %v191
    %v196 = vxor.u32 %v194, 2147483648
    %v197 = vxor.u32 %v195, 2147483648
    %v198 = vmul.f32 %v196, 1.442695
    %v199 = vpow.pop %v198
    %v200 = vmul.f32 %v197, 1.442695
    %v201 = vpow.pop %v200
    %v202 = vadd.f32 %v199, 1.0
    %v203 = vadd.f32 %v201, 1.0
    %v204 = vrcp.pop %v202
    %v205 = vmul.f32 1.0, %v204
    %v206 = vrcp.pop %v203
    %v207 = vmul.f32 1.0, %v206
    %v208 = vtanh.pop %v194
    %v209 = vtanh.pop %v195
    %v210 = vmul.f32 %v205, 0.0
    %v211 = vmul.f32 %v207, 0.0
    %214 = vrot.lane.b32.xlu0 %v208, 64
    %v215 = vpop.permute.xlu0 %214
    %216 = vrot.lane.b32.xlu0 %v209, 64
    %v217 = vpop.permute.xlu0 %216
    %v220 = vmul.f32 %v205, %v215
    %v221 = vmul.f32 %v207, %v217
    %224 = vrot.lane.b32.xlu0 %v220, 32
    %v225 = vpop.permute.xlu0 %224
    %226 = vrot.lane.b32.xlu0 %v221, 32
    %v227 = vpop.permute.xlu0 %226
    %v230 = vadd.f32 %v210, %v225
    %v231 = vadd.f32 %v211, %v227
    %v232 = vtanh.pop %v230
    %v233 = vtanh.pop %v231
    %236 = vrot.lane.b32.xlu0 %v232, 64
    %v237 = vpop.permute.xlu0 %236
    %238 = vrot.lane.b32.xlu0 %v233, 64
    %v239 = vpop.permute.xlu0 %238
    %v242 = vmul.f32 %v205, %v237
    %v243 = vmul.f32 %v207, %v239
    %246 = vrot.lane.b32.xlu0 %v242, 32
    %v247 = vpop.permute.xlu0 %246
    %248 = vrot.lane.b32.xlu0 %v243, 32
    %v249 = vpop.permute.xlu0 %248
    %vm252 = vcmask 253952
    %253 = vst.msk [vmem:[#allocation2] sm:$0x1] %vm252, %v247
    %254 = vst.msk [vmem:[#allocation2 + $0x8] sm:$0x1] %vm252, %v249
    %v255 = vpack.c.bf16 %v242, %v242
    %v256 = vpack.c.bf16 %v243, %v243
    %v259 = vunpack.c.l.b16 %v255
    %v260 = vunpack.c.l.b16 %v256
    %v261 = vrot.slane %v260, 7
    %vm262 = vcmask 1041409
    %v263 = vsel %vm262, %v261, %v259
    %v264 = vpack.c.b16 %v263, %v263
    %265 = vrot.lane.b32.xlu0 %v264, 32
    %v266 = vpop.permute.xlu0 %265
    %v268 = vsel %vm146, %v266, 0
    %270 = vmatprep.subr.bf16.mxu0 0
    %271 = vmatpush1.bf16.msra.mxu0 %v142
    %272 = vmatprep.subr.bf16.mxu0 0
    %273 = vmatpush1.bf16.msra.mxu0 %v143
    %274 = vmatprep.subr.bf16.mxu0 0
    %275 = vmatpush1.bf16.msra.mxu0 0
    %276 = vmatprep.subr.bf16.mxu0 0
    %277 = vmatpush1.bf16.msra.mxu0 0
    %278 = vmatprep.subr.bf16.mxu0 0
    %279 = vmatpush1.bf16.msra.mxu0 0
    %280 = vmatprep.subr.bf16.mxu0 0
    %281 = vmatpush1.bf16.msra.mxu0 0
    %282 = vmatprep.subr.bf16.mxu0 0
    %283 = vmatpush1.bf16.msra.mxu0 0
    %284 = vmatprep.subr.bf16.mxu0 0
    %285 = vmatpush1.bf16.msra.mxu0 0
    %286 = vmatprep.subr.bf16.mxu0 0
    %287 = vmatpush1.bf16.msra.mxu0 0
    %288 = vmatprep.subr.bf16.mxu0 0
    %289 = vmatpush1.bf16.msra.mxu0 0
    %290 = vmatprep.subr.bf16.mxu0 0
    %291 = vmatpush1.bf16.msra.mxu0 0
    %292 = vmatprep.subr.bf16.mxu0 0
    %293 = vmatpush1.bf16.msra.mxu0 0
    %294 = vmatprep.subr.bf16.mxu0 0
    %295 = vmatpush1.bf16.msra.mxu0 0
    %296 = vmatprep.subr.bf16.mxu0 0
    %297 = vmatpush1.bf16.msra.mxu0 0
    %298 = vmatprep.subr.bf16.mxu0 0
    %299 = vmatpush1.bf16.msra.mxu0 0
    %300 = vmatprep.subr.bf16.mxu0 0
    %301 = vmatpush1.bf16.msra.mxu0 0
    %302 = vmatprep.mubr.bf16.mxu0 0
    %303 = vmatmul.mubr.bf16.gmra.mrb[0].mxu0 %v268
    %v304 = vpop.f32.mrb[0].mxu0
    %v305 = vadd.f32 0.0, %v304
    %v306 = vpop.f32.mrb[0].mxu0
    %v307 = vpop.f32.mrb[0].mxu0
    %v308 = vpop.f32.mrb[0].mxu0
    %309 = vdwg.mxu0
    %v311 = vrot.slane %v305, 7
    %v314 = vadd.f32 %v124, %v311
    %v315 = vadd.f32 %v127, %v305
    %v316 = vxor.u32 %v314, 2147483648
    %v317 = vxor.u32 %v315, 2147483648
    %v318 = vmul.f32 %v316, 1.442695
    %v319 = vpow.pop %v318
    %v320 = vmul.f32 %v317, 1.442695
    %v321 = vpow.pop %v320
    %v322 = vadd.f32 %v319, 1.0
    %v323 = vadd.f32 %v321, 1.0
    %v324 = vrcp.pop %v322
    %v325 = vmul.f32 1.0, %v324
    %v326 = vrcp.pop %v323
    %v327 = vmul.f32 1.0, %v326
    %v328 = vtanh.pop %v314
    %v329 = vtanh.pop %v315
    %v332 = vrot.slane %v230, 7
    %v333 = vrot.slane %v231, 7
    %v336 = vmul.f32 %v325, %v332
    %v337 = vmul.f32 %v327, %v333
    %340 = vrot.lane.b32.xlu0 %v328, 64
    %v341 = vpop.permute.xlu0 %340
    %342 = vrot.lane.b32.xlu0 %v329, 64
    %v343 = vpop.permute.xlu0 %342
    %v346 = vmul.f32 %v325, %v341
    %v347 = vmul.f32 %v327, %v343
    %350 = vrot.lane.b32.xlu0 %v346, 32
    %v351 = vpop.permute.xlu0 %350
    %352 = vrot.lane.b32.xlu0 %v347, 32
    %v353 = vpop.permute.xlu0 %352
    %v356 = vadd.f32 %v336, %v351
    %v357 = vadd.f32 %v337, %v353
    %v358 = vtanh.pop %v356
    %v359 = vtanh.pop %v357
    %362 = vrot.lane.b32.xlu0 %v358, 64
    %v363 = vpop.permute.xlu0 %362
    %364 = vrot.lane.b32.xlu0 %v359, 64
    %v365 = vpop.permute.xlu0 %364
    %v368 = vmul.f32 %v325, %v363
    %v369 = vmul.f32 %v327, %v365
    %372 = vrot.lane.b32.xlu0 %v368, 32
    %v373 = vpop.permute.xlu0 %372
    %374 = vrot.lane.b32.xlu0 %v369, 32
    %v375 = vpop.permute.xlu0 %374
    %vm378 = vcmask 254977
    %379 = vst.msk [vmem:[#allocation2] sm:$0x2] %vm378, %v373
    %380 = vst.msk [vmem:[#allocation2 + $0x8] sm:$0x2] %vm378, %v375
    %v381 = vpack.c.bf16 %v368, %v368
    %v382 = vpack.c.bf16 %v369, %v369
    %v385 = vunpack.c.l.b16 %v381
    %v386 = vunpack.c.l.b16 %v382
    %v387 = vrot.slane %v385, 1
    %v388 = vsel %vm262, %v386, %v387
    %v389 = vpack.c.b16 %v388, %v388
    %390 = vrot.lane.b32.xlu0 %v389, 32
    %v391 = vpop.permute.xlu0 %390
    %v393 = vsel %vm146, %v391, 0
    %395 = vmatprep.subr.bf16.mxu0 0
    %396 = vmatpush1.bf16.msra.mxu0 %v142
    %397 = vmatprep.subr.bf16.mxu0 0
    %398 = vmatpush1.bf16.msra.mxu0 %v143
    %399 = vmatprep.subr.bf16.mxu0 0
    %400 = vmatpush1.bf16.msra.mxu0 0
    %401 = vmatprep.subr.bf16.mxu0 0
    %402 = vmatpush1.bf16.msra.mxu0 0
    %403 = vmatprep.subr.bf16.mxu0 0
    %404 = vmatpush1.bf16.msra.mxu0 0
    %405 = vmatprep.subr.bf16.mxu0 0
    %406 = vmatpush1.bf16.msra.mxu0 0
    %407 = vmatprep.subr.bf16.mxu0 0
    %408 = vmatpush1.bf16.msra.mxu0 0
    %409 = vmatprep.subr.bf16.mxu0 0
    %410 = vmatpush1.bf16.msra.mxu0 0
    %411 = vmatprep.subr.bf16.mxu0 0
    %412 = vmatpush1.bf16.msra.mxu0 0
    %413 = vmatprep.subr.bf16.mxu0 0
    %414 = vmatpush1.bf16.msra.mxu0 0
    %415 = vmatprep.subr.bf16.mxu0 0
    %416 = vmatpush1.bf16.msra.mxu0 0
    %417 = vmatprep.subr.bf16.mxu0 0
    %418 = vmatpush1.bf16.msra.mxu0 0
    %419 = vmatprep.subr.bf16.mxu0 0
    %420 = vmatpush1.bf16.msra.mxu0 0
    %421 = vmatprep.subr.bf16.mxu0 0
    %422 = vmatpush1.bf16.msra.mxu0 0
    %423 = vmatprep.subr.bf16.mxu0 0
    %424 = vmatpush1.bf16.msra.mxu0 0
    %425 = vmatprep.subr.bf16.mxu0 0
    %426 = vmatpush1.bf16.msra.mxu0 0
    %427 = vmatprep.mubr.bf16.mxu0 0
    %428 = vmatmul.mubr.bf16.gmra.mrb[0].mxu0 %v393
    %v429 = vpop.f32.mrb[0].mxu0
    %v430 = vadd.f32 0.0, %v429
    %v431 = vpop.f32.mrb[0].mxu0
    %v432 = vpop.f32.mrb[0].mxu0
    %v433 = vpop.f32.mrb[0].mxu0
    %434 = vdwg.mxu0
    %v436 = vrot.slane %v430, 6
    %v437 = vrot.slane %v430, 7
    %v440 = vadd.f32 %v124, %v436
    %v441 = vadd.f32 %v127, %v437
    %v442 = vxor.u32 %v440, 2147483648
    %v443 = vxor.u32 %v441, 2147483648
    %v444 = vmul.f32 %v442, 1.442695
    %v445 = vpow.pop %v444
    %v446 = vmul.f32 %v443, 1.442695
    %v447 = vpow.pop %v446
    %v448 = vadd.f32 %v445, 1.0
    %v449 = vadd.f32 %v447, 1.0
    %v450 = vrcp.pop %v448
    %v451 = vmul.f32 1.0, %v450
    %v452 = vrcp.pop %v449
    %v453 = vmul.f32 1.0, %v452
    %v454 = vtanh.pop %v440
    %v455 = vtanh.pop %v441
    %v458 = vrot.slane %v356, 7
    %v459 = vrot.slane %v357, 7
    %v462 = vmul.f32 %v451, %v458
    %v463 = vmul.f32 %v453, %v459
    %466 = vrot.lane.b32.xlu0 %v454, 64
    %v467 = vpop.permute.xlu0 %466
    %468 = vrot.lane.b32.xlu0 %v455, 64
    %v469 = vpop.permute.xlu0 %468
    %v472 = vmul.f32 %v451, %v467
    %v473 = vmul.f32 %v453, %v469
    %476 = vrot.lane.b32.xlu0 %v472, 32
    %v477 = vpop.permute.xlu0 %476
    %478 = vrot.lane.b32.xlu0 %v473, 32
    %v479 = vpop.permute.xlu0 %478
    %v482 = vadd.f32 %v462, %v477
    %v483 = vadd.f32 %v463, %v479
    %v484 = vtanh.pop %v482
    %v485 = vtanh.pop %v483
    %488 = vrot.lane.b32.xlu0 %v484, 64
    %v489 = vpop.permute.xlu0 %488
    %490 = vrot.lane.b32.xlu0 %v485, 64
    %v491 = vpop.permute.xlu0 %490
    %v494 = vmul.f32 %v451, %v489
    %v495 = vmul.f32 %v453, %v491
    %498 = vrot.lane.b32.xlu0 %v494, 32
    %v499 = vpop.permute.xlu0 %498
    %500 = vrot.lane.b32.xlu0 %v495, 32
    %v501 = vpop.permute.xlu0 %500
    %vm504 = vcmask 256002
    %505 = vst.msk [vmem:[#allocation2] sm:$0x4] %vm504, %v499
    %506 = vst.msk [vmem:[#allocation2 + $0x8] sm:$0x4] %vm504, %v501
    %v507 = vpack.c.bf16 %v494, %v494
    %v508 = vpack.c.bf16 %v495, %v495
    %v511 = vunpack.c.l.b16 %v507
    %v512 = vunpack.c.l.b16 %v508
    %v513 = vrot.slane %v511, 2
    %v514 = vrot.slane %v512, 1
    %v515 = vsel %vm262, %v514, %v513
    %v516 = vpack.c.b16 %v515, %v515
    %517 = vrot.lane.b32.xlu0 %v516, 32
    %v518 = vpop.permute.xlu0 %517
    %v520 = vsel %vm146, %v518, 0
    %522 = vmatprep.subr.bf16.mxu0 0
    %523 = vmatpush1.bf16.msra.mxu0 %v142
    %524 = vmatprep.subr.bf16.mxu0 0
    %525 = vmatpush1.bf16.msra.mxu0 %v143
    %526 = vmatprep.subr.bf16.mxu0 0
    %527 = vmatpush1.bf16.msra.mxu0 0
    %528 = vmatprep.subr.bf16.mxu0 0
    %529 = vmatpush1.bf16.msra.mxu0 0
    %530 = vmatprep.subr.bf16.mxu0 0
    %531 = vmatpush1.bf16.msra.mxu0 0
    %532 = vmatprep.subr.bf16.mxu0 0
    %533 = vmatpush1.bf16.msra.mxu0 0
    %534 = vmatprep.subr.bf16.mxu0 0
    %535 = vmatpush1.bf16.msra.mxu0 0
    %536 = vmatprep.subr.bf16.mxu0 0
    %537 = vmatpush1.bf16.msra.mxu0 0
    %538 = vmatprep.subr.bf16.mxu0 0
    %539 = vmatpush1.bf16.msra.mxu0 0
    %540 = vmatprep.subr.bf16.mxu0 0
    %541 = vmatpush1.bf16.msra.mxu0 0
    %542 = vmatprep.subr.bf16.mxu0 0
    %543 = vmatpush1.bf16.msra.mxu0 0
    %544 = vmatprep.subr.bf16.mxu0 0
    %545 = vmatpush1.bf16.msra.mxu0 0
    %546 = vmatprep.subr.bf16.mxu0 0
    %547 = vmatpush1.bf16.msra.mxu0 0
    %548 = vmatprep.subr.bf16.mxu0 0
    %549 = vmatpush1.bf16.msra.mxu0 0
    %550 = vmatprep.subr.bf16.mxu0 0
    %551 = vmatpush1.bf16.msra.mxu0 0
    %552 = vmatprep.subr.bf16.mxu0 0
    %553 = vmatpush1.bf16.msra.mxu0 0
    %554 = vmatprep.mubr.bf16.mxu0 0
    %555 = vmatmul.mubr.bf16.gmra.mrb[0].mxu0 %v520
    %v556 = vpop.f32.mrb[0].mxu0
    %v557 = vadd.f32 0.0, %v556
    %v558 = vpop.f32.mrb[0].mxu0
    %v559 = vpop.f32.mrb[0].mxu0
    %v560 = vpop.f32.mrb[0].mxu0
    %561 = vdwg.mxu0
    %v563 = vrot.slane %v557, 5
    %v564 = vrot.slane %v557, 6
    %v567 = vadd.f32 %v124, %v563
    %v568 = vadd.f32 %v127, %v564
    %v569 = vxor.u32 %v567, 2147483648
    %v570 = vxor.u32 %v568, 2147483648
    %v571 = vmul.f32 %v569, 1.442695
    %v572 = vpow.pop %v571
    %v573 = vmul.f32 %v570, 1.442695
    %v574 = vpow.pop %v573
    %v575 = vadd.f32 %v572, 1.0
    %v576 = vadd.f32 %v574, 1.0
    %v577 = vrcp.pop %v575
    %v578 = vmul.f32 1.0, %v577
    %v579 = vrcp.pop %v576
    %v580 = vmul.f32 1.0, %v579
    %v581 = vtanh.pop %v567
    %v582 = vtanh.pop %v568
    %v585 = vrot.slane %v482, 7
    %v586 = vrot.slane %v483, 7
    %v589 = vmul.f32 %v578, %v585
    %v590 = vmul.f32 %v580, %v586
    %593 = vrot.lane.b32.xlu0 %v581, 64
    %v594 = vpop.permute.xlu0 %593
    %595 = vrot.lane.b32.xlu0 %v582, 64
    %v596 = vpop.permute.xlu0 %595
    %v599 = vmul.f32 %v578, %v594
    %v600 = vmul.f32 %v580, %v596
    %603 = vrot.lane.b32.xlu0 %v599, 32
    %v604 = vpop.permute.xlu0 %603
    %605 = vrot.lane.b32.xlu0 %v600, 32
    %v606 = vpop.permute.xlu0 %605
    %v609 = vadd.f32 %v589, %v604
    %v610 = vadd.f32 %v590, %v606
    %v611 = vtanh.pop %v609
    %v612 = vtanh.pop %v610
    %615 = vrot.lane.b32.xlu0 %v611, 64
    %v616 = vpop.permute.xlu0 %615
    %617 = vrot.lane.b32.xlu0 %v612, 64
    %v618 = vpop.permute.xlu0 %617
    %v621 = vmul.f32 %v578, %v616
    %v622 = vmul.f32 %v580, %v618
    %625 = vrot.lane.b32.xlu0 %v621, 32
    %v626 = vpop.permute.xlu0 %625
    %627 = vrot.lane.b32.xlu0 %v622, 32
    %v628 = vpop.permute.xlu0 %627
    %vm631 = vcmask 257027
    %632 = vst.msk [vmem:[#allocation2] sm:$0x8] %vm631, %v626
    %633 = vst.msk [vmem:[#allocation2 + $0x8] sm:$0x8] %vm631, %v628
    %v634 = vpack.c.bf16 %v621, %v621
    %v635 = vpack.c.bf16 %v622, %v622
    %v638 = vunpack.c.l.b16 %v634
    %v639 = vunpack.c.l.b16 %v635
    %v640 = vrot.slane %v638, 3
    %v641 = vrot.slane %v639, 2
    %v642 = vsel %vm262, %v641, %v640
    %v643 = vpack.c.b16 %v642, %v642
    %644 = vrot.lane.b32.xlu0 %v643, 32
    %v645 = vpop.permute.xlu0 %644
    %v647 = vsel %vm146, %v645, 0
    %649 = vmatprep.subr.bf16.mxu0 0
    %650 = vmatpush1.bf16.msra.mxu0 %v142
    %651 = vmatprep.subr.bf16.mxu0 0
    %652 = vmatpush1.bf16.msra.mxu0 %v143
    %653 = vmatprep.subr.bf16.mxu0 0
    %654 = vmatpush1.bf16.msra.mxu0 0
    %655 = vmatprep.subr.bf16.mxu0 0
    %656 = vmatpush1.bf16.msra.mxu0 0
    %657 = vmatprep.subr.bf16.mxu0 0
    %658 = vmatpush1.bf16.msra.mxu0 0
    %659 = vmatprep.subr.bf16.mxu0 0
    %660 = vmatpush1.bf16.msra.mxu0 0
    %661 = vmatprep.subr.bf16.mxu0 0
    %662 = vmatpush1.bf16.msra.mxu0 0
    %663 = vmatprep.subr.bf16.mxu0 0
    %664 = vmatpush1.bf16.msra.mxu0 0
    %665 = vmatprep.subr.bf16.mxu0 0
    %666 = vmatpush1.bf16.msra.mxu0 0
    %667 = vmatprep.subr.bf16.mxu0 0
    %668 = vmatpush1.bf16.msra.mxu0 0
    %669 = vmatprep.subr.bf16.mxu0 0
    %670 = vmatpush1.bf16.msra.mxu0 0
    %671 = vmatprep.subr.bf16.mxu0 0
    %672 = vmatpush1.bf16.msra.mxu0 0
    %673 = vmatprep.subr.bf16.mxu0 0
    %674 = vmatpush1.bf16.msra.mxu0 0
    %675 = vmatprep.subr.bf16.mxu0 0
    %676 = vmatpush1.bf16.msra.mxu0 0
    %677 = vmatprep.subr.bf16.mxu0 0
    %678 = vmatpush1.bf16.msra.mxu0 0
    %679 = vmatprep.subr.bf16.mxu0 0
    %680 = vmatpush1.bf16.msra.mxu0 0
    %681 = vmatprep.mubr.bf16.mxu0 0
    %682 = vmatmul.mubr.bf16.gmra.mrb[0].mxu0 %v647
    %v683 = vpop.f32.mrb[0].mxu0
    %v684 = vadd.f32 0.0, %v683
    %v685 = vpop.f32.mrb[0].mxu0
    %v686 = vpop.f32.mrb[0].mxu0
    %v687 = vpop.f32.mrb[0].mxu0
    %688 = vdwg.mxu0
    %v690 = vrot.slane %v684, 4
    %v691 = vrot.slane %v684, 5
    %v694 = vadd.f32 %v124, %v690
    %v695 = vadd.f32 %v127, %v691
    %v696 = vxor.u32 %v694, 2147483648
    %v697 = vxor.u32 %v695, 2147483648
    %v698 = vmul.f32 %v696, 1.442695
    %v699 = vpow.pop %v698
    %v700 = vmul.f32 %v697, 1.442695
    %v701 = vpow.pop %v700
    %v702 = vadd.f32 %v699, 1.0
    %v703 = vadd.f32 %v701, 1.0
    %v704 = vrcp.pop %v702
    %v705 = vmul.f32 1.0, %v704
    %v706 = vrcp.pop %v703
    %v707 = vmul.f32 1.0, %v706
    %v708 = vtanh.pop %v694
    %v709 = vtanh.pop %v695
    %v712 = vrot.slane %v609, 7
    %v713 = vrot.slane %v610, 7
    %v716 = vmul.f32 %v705, %v712
    %v717 = vmul.f32 %v707, %v713
    %720 = vrot.lane.b32.xlu0 %v708, 64
    %v721 = vpop.permute.xlu0 %720
    %722 = vrot.lane.b32.xlu0 %v709, 64
    %v723 = vpop.permute.xlu0 %722
    %v726 = vmul.f32 %v705, %v721
    %v727 = vmul.f32 %v707, %v723
    %730 = vrot.lane.b32.xlu0 %v726, 32
    %v731 = vpop.permute.xlu0 %730
    %732 = vrot.lane.b32.xlu0 %v727, 32
    %v733 = vpop.permute.xlu0 %732
    %v736 = vadd.f32 %v716, %v731
    %v737 = vadd.f32 %v717, %v733
    %v738 = vtanh.pop %v736
    %v739 = vtanh.pop %v737
    %742 = vrot.lane.b32.xlu0 %v738, 64
    %v743 = vpop.permute.xlu0 %742
    %744 = vrot.lane.b32.xlu0 %v739, 64
    %v745 = vpop.permute.xlu0 %744
    %v748 = vmul.f32 %v705, %v743
    %v749 = vmul.f32 %v707, %v745
    %752 = vrot.lane.b32.xlu0 %v748, 32
    %v753 = vpop.permute.xlu0 %752
    %754 = vrot.lane.b32.xlu0 %v749, 32
    %v755 = vpop.permute.xlu0 %754
    %vm758 = vcmask 258052
    %759 = vst.msk [vmem:[#allocation2] sm:$0x10] %vm758, %v753
    %760 = vst.msk [vmem:[#allocation2 + $0x8] sm:$0x10] %vm758, %v755
    %v761 = vpack.c.bf16 %v748, %v748
    %v762 = vpack.c.bf16 %v749, %v749
    %v765 = vunpack.c.l.b16 %v761
    %v766 = vunpack.c.l.b16 %v762
    %v767 = vrot.slane %v765, 4
    %v768 = vrot.slane %v766, 3
    %v769 = vsel %vm262, %v768, %v767
    %v770 = vpack.c.b16 %v769, %v769
    %771 = vrot.lane.b32.xlu0 %v770, 32
    %v772 = vpop.permute.xlu0 %771
    %v774 = vsel %vm146, %v772, 0
    %776 = vmatprep.subr.bf16.mxu0 0
    %777 = vmatpush1.bf16.msra.mxu0 %v142
    %778 = vmatprep.subr.bf16.mxu0 0
    %779 = vmatpush1.bf16.msra.mxu0 %v143
    %780 = vmatprep.subr.bf16.mxu0 0
    %781 = vmatpush1.bf16.msra.mxu0 0
    %782 = vmatprep.subr.bf16.mxu0 0
    %783 = vmatpush1.bf16.msra.mxu0 0
    %784 = vmatprep.subr.bf16.mxu0 0
    %785 = vmatpush1.bf16.msra.mxu0 0
    %786 = vmatprep.subr.bf16.mxu0 0
    %787 = vmatpush1.bf16.msra.mxu0 0
    %788 = vmatprep.subr.bf16.mxu0 0
    %789 = vmatpush1.bf16.msra.mxu0 0
    %790 = vmatprep.subr.bf16.mxu0 0
    %791 = vmatpush1.bf16.msra.mxu0 0
    %792 = vmatprep.subr.bf16.mxu0 0
    %793 = vmatpush1.bf16.msra.mxu0 0
    %794 = vmatprep.subr.bf16.mxu0 0
    %795 = vmatpush1.bf16.msra.mxu0 0
    %796 = vmatprep.subr.bf16.mxu0 0
    %797 = vmatpush1.bf16.msra.mxu0 0
    %798 = vmatprep.subr.bf16.mxu0 0
    %799 = vmatpush1.bf16.msra.mxu0 0
    %800 = vmatprep.subr.bf16.mxu0 0
    %801 = vmatpush1.bf16.msra.mxu0 0
    %802 = vmatprep.subr.bf16.mxu0 0
    %803 = vmatpush1.bf16.msra.mxu0 0
    %804 = vmatprep.subr.bf16.mxu0 0
    %805 = vmatpush1.bf16.msra.mxu0 0
    %806 = vmatprep.subr.bf16.mxu0 0
    %807 = vmatpush1.bf16.msra.mxu0 0
    %808 = vmatprep.mubr.bf16.mxu0 0
    %809 = vmatmul.mubr.bf16.gmra.mrb[0].mxu0 %v774
    %v810 = vpop.f32.mrb[0].mxu0
    %v811 = vadd.f32 0.0, %v810
    %v812 = vpop.f32.mrb[0].mxu0
    %v813 = vpop.f32.mrb[0].mxu0
    %v814 = vpop.f32.mrb[0].mxu0
    %815 = vdwg.mxu0
    %v817 = vrot.slane %v811, 3
    %v818 = vrot.slane %v811, 4
    %v821 = vadd.f32 %v124, %v817
    %v822 = vadd.f32 %v127, %v818
    %v823 = vxor.u32 %v821, 2147483648
    %v824 = vxor.u32 %v822, 2147483648
    %v825 = vmul.f32 %v823, 1.442695
    %v826 = vpow.pop %v825
    %v827 = vmul.f32 %v824, 1.442695
    %v828 = vpow.pop %v827
    %v829 = vadd.f32 %v826, 1.0
    %v830 = vadd.f32 %v828, 1.0
    %v831 = vrcp.pop %v829
    %v832 = vmul.f32 1.0, %v831
    %v833 = vrcp.pop %v830
    %v834 = vmul.f32 1.0, %v833
    %v835 = vtanh.pop %v821
    %v836 = vtanh.pop %v822
    %v839 = vrot.slane %v736, 7
    %v840 = vrot.slane %v737, 7
    %v843 = vmul.f32 %v832, %v839
    %v844 = vmul.f32 %v834, %v840
    %847 = vrot.lane.b32.xlu0 %v835, 64
    %v848 = vpop.permute.xlu0 %847
    %849 = vrot.lane.b32.xlu0 %v836, 64
    %v850 = vpop.permute.xlu0 %849
    %v853 = vmul.f32 %v832, %v848
    %v854 = vmul.f32 %v834, %v850
    %857 = vrot.lane.b32.xlu0 %v853, 32
    %v858 = vpop.permute.xlu0 %857
    %859 = vrot.lane.b32.xlu0 %v854, 32
    %v860 = vpop.permute.xlu0 %859
    %v863 = vadd.f32 %v843, %v858
    %v864 = vadd.f32 %v844, %v860
    %v865 = vtanh.pop %v863
    %v866 = vtanh.pop %v864
    %869 = vrot.lane.b32.xlu0 %v865, 64
    %v870 = vpop.permute.xlu0 %869
    %871 = vrot.lane.b32.xlu0 %v866, 64
    %v872 = vpop.permute.xlu0 %871
    %v875 = vmul.f32 %v832, %v870
    %v876 = vmul.f32 %v834, %v872
    %879 = vrot.lane.b32.xlu0 %v875, 32
    %v880 = vpop.permute.xlu0 %879
    %881 = vrot.lane.b32.xlu0 %v876, 32
    %v882 = vpop.permute.xlu0 %881
    %vm885 = vcmask 259077
    %886 = vst.msk [vmem:[#allocation2] sm:$0x20] %vm885, %v880
    %887 = vst.msk [vmem:[#allocation2 + $0x8] sm:$0x20] %vm885, %v882
    %v888 = vpack.c.bf16 %v875, %v875
    %v889 = vpack.c.bf16 %v876, %v876
    %v892 = vunpack.c.l.b16 %v888
    %v893 = vunpack.c.l.b16 %v889
    %v894 = vrot.slane %v892, 5
    %v895 = vrot.slane %v893, 4
    %v896 = vsel %vm262, %v895, %v894
    %v897 = vpack.c.b16 %v896, %v896
    %898 = vrot.lane.b32.xlu0 %v897, 32
    %v899 = vpop.permute.xlu0 %898
    %v901 = vsel %vm146, %v899, 0
    %903 = vmatprep.subr.bf16.mxu0 0
    %904 = vmatpush1.bf16.msra.mxu0 %v142
    %905 = vmatprep.subr.bf16.mxu0 0
    %906 = vmatpush1.bf16.msra.mxu0 %v143
    %907 = vmatprep.subr.bf16.mxu0 0
    %908 = vmatpush1.bf16.msra.mxu0 0
    %909 = vmatprep.subr.bf16.mxu0 0
    %910 = vmatpush1.bf16.msra.mxu0 0
    %911 = vmatprep.subr.bf16.mxu0 0
    %912 = vmatpush1.bf16.msra.mxu0 0
    %913 = vmatprep.subr.bf16.mxu0 0
    %914 = vmatpush1.bf16.msra.mxu0 0
    %915 = vmatprep.subr.bf16.mxu0 0
    %916 = vmatpush1.bf16.msra.mxu0 0
    %917 = vmatprep.subr.bf16.mxu0 0
    %918 = vmatpush1.bf16.msra.mxu0 0
    %919 = vmatprep.subr.bf16.mxu0 0
    %920 = vmatpush1.bf16.msra.mxu0 0
    %921 = vmatprep.subr.bf16.mxu0 0
    %922 = vmatpush1.bf16.msra.mxu0 0
    %923 = vmatprep.subr.bf16.mxu0 0
    %924 = vmatpush1.bf16.msra.mxu0 0
    %925 = vmatprep.subr.bf16.mxu0 0
    %926 = vmatpush1.bf16.msra.mxu0 0
    %927 = vmatprep.subr.bf16.mxu0 0
    %928 = vmatpush1.bf16.msra.mxu0 0
    %929 = vmatprep.subr.bf16.mxu0 0
    %930 = vmatpush1.bf16.msra.mxu0 0
    %931 = vmatprep.subr.bf16.mxu0 0
    %932 = vmatpush1.bf16.msra.mxu0 0
    %933 = vmatprep.subr.bf16.mxu0 0
    %934 = vmatpush1.bf16.msra.mxu0 0
    %935 = vmatprep.mubr.bf16.mxu0 0
    %936 = vmatmul.mubr.bf16.gmra.mrb[0].mxu0 %v901
    %v937 = vpop.f32.mrb[0].mxu0
    %v938 = vadd.f32 0.0, %v937
    %v939 = vpop.f32.mrb[0].mxu0
    %v940 = vpop.f32.mrb[0].mxu0
    %v941 = vpop.f32.mrb[0].mxu0
    %942 = vdwg.mxu0
    %v944 = vrot.slane %v938, 2
    %v945 = vrot.slane %v938, 3
    %v948 = vadd.f32 %v124, %v944
    %v949 = vadd.f32 %v127, %v945
    %v950 = vxor.u32 %v948, 2147483648
    %v951 = vxor.u32 %v949, 2147483648
    %v952 = vmul.f32 %v950, 1.442695
    %v953 = vpow.pop %v952
    %v954 = vmul.f32 %v951, 1.442695
    %v955 = vpow.pop %v954
    %v956 = vadd.f32 %v953, 1.0
    %v957 = vadd.f32 %v955, 1.0
    %v958 = vrcp.pop %v956
    %v959 = vmul.f32 1.0, %v958
    %v960 = vrcp.pop %v957
    %v961 = vmul.f32 1.0, %v960
    %v962 = vtanh.pop %v948
    %v963 = vtanh.pop %v949
    %v966 = vrot.slane %v863, 7
    %v967 = vrot.slane %v864, 7
    %v970 = vmul.f32 %v959, %v966
    %v971 = vmul.f32 %v961, %v967
    %974 = vrot.lane.b32.xlu0 %v962, 64
    %v975 = vpop.permute.xlu0 %974
    %976 = vrot.lane.b32.xlu0 %v963, 64
    %v977 = vpop.permute.xlu0 %976
    %v980 = vmul.f32 %v959, %v975
    %v981 = vmul.f32 %v961, %v977
    %984 = vrot.lane.b32.xlu0 %v980, 32
    %v985 = vpop.permute.xlu0 %984
    %986 = vrot.lane.b32.xlu0 %v981, 32
    %v987 = vpop.permute.xlu0 %986
    %v990 = vadd.f32 %v970, %v985
    %v991 = vadd.f32 %v971, %v987
    %v992 = vtanh.pop %v990
    %v993 = vtanh.pop %v991
    %996 = vrot.lane.b32.xlu0 %v992, 64
    %v997 = vpop.permute.xlu0 %996
    %998 = vrot.lane.b32.xlu0 %v993, 64
    %v999 = vpop.permute.xlu0 %998
    %v1002 = vmul.f32 %v959, %v997
    %v1003 = vmul.f32 %v961, %v999
    %1006 = vrot.lane.b32.xlu0 %v1002, 32
    %v1007 = vpop.permute.xlu0 %1006
    %1008 = vrot.lane.b32.xlu0 %v1003, 32
    %v1009 = vpop.permute.xlu0 %1008
    %vm1012 = vcmask 260102
    %1013 = vst.msk [vmem:[#allocation2] sm:$0x40] %vm1012, %v1007
    %1014 = vst.msk [vmem:[#allocation2 + $0x8] sm:$0x40] %vm1012, %v1009
    %v1015 = vpack.c.bf16 %v1002, %v1002
    %v1016 = vpack.c.bf16 %v1003, %v1003
    %v1019 = vunpack.c.l.b16 %v1015
    %v1020 = vunpack.c.l.b16 %v1016
    %v1021 = vrot.slane %v1019, 6
    %v1022 = vrot.slane %v1020, 5
    %v1023 = vsel %vm262, %v1022, %v1021
    %v1024 = vpack.c.b16 %v1023, %v1023
    %1025 = vrot.lane.b32.xlu0 %v1024, 32
    %v1026 = vpop.permute.xlu0 %1025
    %v1028 = vsel %vm146, %v1026, 0
    %1030 = vmatprep.subr.bf16.mxu0 0
    %1031 = vmatpush1.bf16.msra.mxu0 %v142
    %1032 = vmatprep.subr.bf16.mxu0 0
    %1033 = vmatpush1.bf16.msra.mxu0 %v143
    %1034 = vmatprep.subr.bf16.mxu0 0
    %1035 = vmatpush1.bf16.msra.mxu0 0
    %1036 = vmatprep.subr.bf16.mxu0 0
    %1037 = vmatpush1.bf16.msra.mxu0 0
    %1038 = vmatprep.subr.bf16.mxu0 0
    %1039 = vmatpush1.bf16.msra.mxu0 0
    %1040 = vmatprep.subr.bf16.mxu0 0
    %1041 = vmatpush1.bf16.msra.mxu0 0
    %1042 = vmatprep.subr.bf16.mxu0 0
    %1043 = vmatpush1.bf16.msra.mxu0 0
    %1044 = vmatprep.subr.bf16.mxu0 0
    %1045 = vmatpush1.bf16.msra.mxu0 0
    %1046 = vmatprep.subr.bf16.mxu0 0
    %1047 = vmatpush1.bf16.msra.mxu0 0
    %1048 = vmatprep.subr.bf16.mxu0 0
    %1049 = vmatpush1.bf16.msra.mxu0 0
    %1050 = vmatprep.subr.bf16.mxu0 0
    %1051 = vmatpush1.bf16.msra.mxu0 0
    %1052 = vmatprep.subr.bf16.mxu0 0
    %1053 = vmatpush1.bf16.msra.mxu0 0
    %1054 = vmatprep.subr.bf16.mxu0 0
    %1055 = vmatpush1.bf16.msra.mxu0 0
    %1056 = vmatprep.subr.bf16.mxu0 0
    %1057 = vmatpush1.bf16.msra.mxu0 0
    %1058 = vmatprep.subr.bf16.mxu0 0
    %1059 = vmatpush1.bf16.msra.mxu0 0
    %1060 = vmatprep.subr.bf16.mxu0 0
    %1061 = vmatpush1.bf16.msra.mxu0 0
    %1062 = vmatprep.mubr.bf16.mxu0 0
    %1063 = vmatmul.mubr.bf16.gmra.mrb[0].mxu0 %v1028
    %v1064 = vpop.f32.mrb[0].mxu0
    %v1065 = vadd.f32 0.0, %v1064
    %v1066 = vpop.f32.mrb[0].mxu0
    %v1067 = vpop.f32.mrb[0].mxu0
    %v1068 = vpop.f32.mrb[0].mxu0
    %1069 = vdwg.mxu0
    %v1071 = vrot.slane %v1065, 1
    %v1072 = vrot.slane %v1065, 2
    %v1075 = vadd.f32 %v124, %v1071
    %v1076 = vadd.f32 %v127, %v1072
    %v1077 = vxor.u32 %v1075, 2147483648
    %v1078 = vxor.u32 %v1076, 2147483648
    %v1079 = vmul.f32 %v1077, 1.442695
    %v1080 = vpow.pop %v1079
    %v1081 = vmul.f32 %v1078, 1.442695
    %v1082 = vpow.pop %v1081
    %v1083 = vadd.f32 %v1080, 1.0
    %v1084 = vadd.f32 %v1082, 1.0
    %v1085 = vrcp.pop %v1083
    %v1086 = vmul.f32 1.0, %v1085
    %v1087 = vrcp.pop %v1084
    %v1088 = vmul.f32 1.0, %v1087
    %v1089 = vtanh.pop %v1075
    %v1090 = vtanh.pop %v1076
    %v1093 = vrot.slane %v990, 7
    %v1094 = vrot.slane %v991, 7
    %v1097 = vmul.f32 %v1086, %v1093
    %v1098 = vmul.f32 %v1088, %v1094
    %1101 = vrot.lane.b32.xlu0 %v1089, 64
    %v1102 = vpop.permute.xlu0 %1101
    %1103 = vrot.lane.b32.xlu0 %v1090, 64
    %v1104 = vpop.permute.xlu0 %1103
    %v1107 = vmul.f32 %v1086, %v1102
    %v1108 = vmul.f32 %v1088, %v1104
    %1111 = vrot.lane.b32.xlu0 %v1107, 32
    %v1112 = vpop.permute.xlu0 %1111
    %1113 = vrot.lane.b32.xlu0 %v1108, 32
    %v1114 = vpop.permute.xlu0 %1113
    %v1117 = vadd.f32 %v1097, %v1112
    %v1118 = vadd.f32 %v1098, %v1114
    %v1119 = vtanh.pop %v1117
    %v1120 = vtanh.pop %v1118
    %1123 = vrot.lane.b32.xlu0 %v1119, 64
    %v1124 = vpop.permute.xlu0 %1123
    %1125 = vrot.lane.b32.xlu0 %v1120, 64
    %v1126 = vpop.permute.xlu0 %1125
    %v1129 = vmul.f32 %v1086, %v1124
    %v1130 = vmul.f32 %v1088, %v1126
    %1133 = vrot.lane.b32.xlu0 %v1129, 32
    %v1134 = vpop.permute.xlu0 %1133
    %1135 = vrot.lane.b32.xlu0 %v1130, 32
    %v1136 = vpop.permute.xlu0 %1135
    %vm1139 = vcmask 261127
    %1140 = vst.msk [vmem:[#allocation2] sm:$0x80] %vm1139, %v1134
    %1141 = vst.msk [vmem:[#allocation2 + $0x8] sm:$0x80] %vm1139, %v1136
    %v1142 = vld [vmem:[#allocation2] sm:$0xff]
    %v1143 = vld [vmem:[#allocation2 + $0x8] sm:$0xff]
    %v1144 = vpack.c.bf16 %v1143, %v1142
    %v1145 = vld [vmem:[%s4] sm:$0xf]
    %v1146 = vld [vmem:[%s4 + $0x4] sm:$0xf]
    %v1147 = vld [vmem:[%s4 + $0x8] sm:$0xf]
    %v1148 = vld [vmem:[%s4 + $0xc] sm:$0xf]
    %v1149 = vld [vmem:[#allocation7] sm:$0x1]
    %v1151 = vlaneseq
    %v1152 = vshrl.u32 %v1151, 7
    %v1153 = vsub.s32 0, %v1152
    %v1154 = vrot.slane %v1149, %v1153
    %v1160 = vunpack.c.l.b16 %v1145
    %v1161 = vunpack.c.l.b16 %v1146
    %v1162 = vunpack.c.l.b16 %v1147
    %v1163 = vunpack.c.l.b16 %v1148
    %v1164 = vpack.c.b16 %v1161, %v1160
    %v1165 = vpack.c.b16 %v1163, %v1162
    %v1169 = vsel %vm146, %v1144, 0
    %1171 = vmatprep.subr.bf16.mxu0 0
    %1172 = vmatpush1.bf16.msra.mxu0 %v1164
    %1173 = vmatprep.subr.bf16.mxu0 0
    %1174 = vmatpush1.bf16.msra.mxu0 %v1165
    %1175 = vmatprep.subr.bf16.mxu0 0
    %1176 = vmatpush1.bf16.msra.mxu0 0
    %1177 = vmatprep.subr.bf16.mxu0 0
    %1178 = vmatpush1.bf16.msra.mxu0 0
    %1179 = vmatprep.subr.bf16.mxu0 0
    %1180 = vmatpush1.bf16.msra.mxu0 0
    %1181 = vmatprep.subr.bf16.mxu0 0
    %1182 = vmatpush1.bf16.msra.mxu0 0
    %1183 = vmatprep.subr.bf16.mxu0 0
    %1184 = vmatpush1.bf16.msra.mxu0 0
    %1185 = vmatprep.subr.bf16.mxu0 0
    %1186 = vmatpush1.bf16.msra.mxu0 0
    %1187 = vmatprep.subr.bf16.mxu0 0
    %1188 = vmatpush1.bf16.msra.mxu0 0
    %1189 = vmatprep.subr.bf16.mxu0 0
    %1190 = vmatpush1.bf16.msra.mxu0 0
    %1191 = vmatprep.subr.bf16.mxu0 0
    %1192 = vmatpush1.bf16.msra.mxu0 0
    %1193 = vmatprep.subr.bf16.mxu0 0
    %1194 = vmatpush1.bf16.msra.mxu0 0
    %1195 = vmatprep.subr.bf16.mxu0 0
    %1196 = vmatpush1.bf16.msra.mxu0 0
    %1197 = vmatprep.subr.bf16.mxu0 0
    %1198 = vmatpush1.bf16.msra.mxu0 0
    %1199 = vmatprep.subr.bf16.mxu0 0
    %1200 = vmatpush1.bf16.msra.mxu0 0
    %1201 = vmatprep.subr.bf16.mxu0 0
    %1202 = vmatpush1.bf16.msra.mxu0 0
    %1203 = vmatprep.mubr.bf16.mxu0 0
    %1204 = vmatmul.mubr.bf16.gmra.mrb[0].mxu0 %v1169
    %v1205 = vpop.f32.mrb[0].mxu0
    %v1206 = vadd.f32 %v1154, %v1205
    %v1207 = vpop.f32.mrb[0].mxu0
    %v1208 = vpop.f32.mrb[0].mxu0
    %v1209 = vadd.f32 %v1154, %v1208
    %v1210 = vpop.f32.mrb[0].mxu0
    %1211 = vdwg.mxu0
    %v1212 = vld [vmem:[%s5] sm:$0xf]
    %v1213 = vld [vmem:[%s5 + $0x4] sm:$0xf]
    %v1214 = vld [vmem:[%s5 + $0x8] sm:$0xf]
    %v1215 = vld [vmem:[%s5 + $0xc] sm:$0xf]
    %v1220 = vunpack.c.l.b16 %v1212
    %v1221 = vunpack.c.l.b16 %v1213
    %v1222 = vunpack.c.l.b16 %v1214
    %v1223 = vunpack.c.l.b16 %v1215
    %v1224 = vpack.c.b16 %v1221, %v1220
    %v1225 = vpack.c.b16 %v1223, %v1222
    %1228 = vmatprep.subr.bf16.mxu0 0
    %1229 = vmatpush1.bf16.msra.mxu0 %v1224
    %1230 = vmatprep.subr.bf16.mxu0 0
    %1231 = vmatpush1.bf16.msra.mxu0 %v1225
    %1232 = vmatprep.subr.bf16.mxu0 0
    %1233 = vmatpush1.bf16.msra.mxu0 0
    %1234 = vmatprep.subr.bf16.mxu0 0
    %1235 = vmatpush1.bf16.msra.mxu0 0
    %1236 = vmatprep.subr.bf16.mxu0 0
    %1237 = vmatpush1.bf16.msra.mxu0 0
    %1238 = vmatprep.subr.bf16.mxu0 0
    %1239 = vmatpush1.bf16.msra.mxu0 0
    %1240 = vmatprep.subr.bf16.mxu0 0
    %1241 = vmatpush1.bf16.msra.mxu0 0
    %1242 = vmatprep.subr.bf16.mxu0 0
    %1243 = vmatpush1.bf16.msra.mxu0 0
    %1244 = vmatprep.subr.bf16.mxu0 0
    %1245 = vmatpush1.bf16.msra.mxu0 0
    %1246 = vmatprep.subr.bf16.mxu0 0
    %1247 = vmatpush1.bf16.msra.mxu0 0
    %1248 = vmatprep.subr.bf16.mxu0 0
    %1249 = vmatpush1.bf16.msra.mxu0 0
    %1250 = vmatprep.subr.bf16.mxu0 0
    %1251 = vmatpush1.bf16.msra.mxu0 0
    %1252 = vmatprep.subr.bf16.mxu0 0
    %1253 = vmatpush1.bf16.msra.mxu0 0
    %1254 = vmatprep.subr.bf16.mxu0 0
    %1255 = vmatpush1.bf16.msra.mxu0 0
    %1256 = vmatprep.subr.bf16.mxu0 0
    %1257 = vmatpush1.bf16.msra.mxu0 0
    %1258 = vmatprep.subr.bf16.mxu0 0
    %1259 = vmatpush1.bf16.msra.mxu0 0
    %1260 = vmatprep.mubr.bf16.mxu0 0
    %1261 = vmatmul.mubr.bf16.gmra.mrb[0].mxu0 %v148
    %v1262 = vpop.f32.mrb[0].mxu0
    %v1263 = vadd.f32 0.0, %v1262
    %v1264 = vpop.f32.mrb[0].mxu0
    %v1265 = vpop.f32.mrb[0].mxu0
    %v1266 = vpop.f32.mrb[0].mxu0
    %1267 = vdwg.mxu0
    %v1269 = vrot.slane %v1263, 1
    %v1272 = vadd.f32 %v1206, %v1263
    %v1273 = vadd.f32 %v1209, %v1269
    %v1274 = vxor.u32 %v1272, 2147483648
    %v1275 = vxor.u32 %v1273, 2147483648
    %v1276 = vmul.f32 %v1274, 1.442695
    %v1277 = vpow.pop %v1276
    %v1278 = vmul.f32 %v1275, 1.442695
    %v1279 = vpow.pop %v1278
    %v1280 = vadd.f32 %v1277, 1.0
    %v1281 = vadd.f32 %v1279, 1.0
    %v1282 = vrcp.pop %v1280
    %v1283 = vmul.f32 1.0, %v1282
    %v1284 = vrcp.pop %v1281
    %v1285 = vmul.f32 1.0, %v1284
    %v1286 = vtanh.pop %v1272
    %v1287 = vtanh.pop %v1273
    %v1288 = vmul.f32 %v1283, 0.0
    %v1289 = vmul.f32 %v1285, 0.0
    %1292 = vrot.lane.b32.xlu0 %v1286, 64
    %v1293 = vpop.permute.xlu0 %1292
    %1294 = vrot.lane.b32.xlu0 %v1287, 64
    %v1295 = vpop.permute.xlu0 %1294
    %v1298 = vmul.f32 %v1283, %v1293
    %v1299 = vmul.f32 %v1285, %v1295
    %1302 = vrot.lane.b32.xlu0 %v1298, 32
    %v1303 = vpop.permute.xlu0 %1302
    %1304 = vrot.lane.b32.xlu0 %v1299, 32
    %v1305 = vpop.permute.xlu0 %1304
    %v1308 = vadd.f32 %v1288, %v1303
    %v1309 = vadd.f32 %v1289, %v1305
    %v1310 = vtanh.pop %v1308
    %v1311 = vtanh.pop %v1309
    %1314 = vrot.lane.b32.xlu0 %v1310, 64
    %v1315 = vpop.permute.xlu0 %1314
    %1316 = vrot.lane.b32.xlu0 %v1311, 64
    %v1317 = vpop.permute.xlu0 %1316
    %v1320 = vmul.f32 %v1283, %v1315
    %v1321 = vmul.f32 %v1285, %v1317
    %1324 = vrot.lane.b32.xlu0 %v1320, 32
    %v1325 = vpop.permute.xlu0 %1324
    %1326 = vrot.lane.b32.xlu0 %v1321, 32
    %v1327 = vpop.permute.xlu0 %1326
    %1330 = vst.msk [vmem:[#allocation3] sm:$0x1] %vm252, %v1325
    %1331 = vst.msk [vmem:[#allocation3 + $0x8] sm:$0x1] %vm252, %v1327
    %v1332 = vpack.c.bf16 %v1320, %v1320
    %v1333 = vpack.c.bf16 %v1321, %v1321
    %v1336 = vunpack.c.l.b16 %v1332
    %v1337 = vunpack.c.l.b16 %v1333
    %v1338 = vrot.slane %v1337, 7
    %v1339 = vsel %vm262, %v1338, %v1336
    %v1340 = vpack.c.b16 %v1339, %v1339
    %1341 = vrot.lane.b32.xlu0 %v1340, 32
    %v1342 = vpop.permute.xlu0 %1341
    %v1344 = vsel %vm146, %v1342, 0
    %1346 = vmatprep.subr.bf16.mxu0 0
    %1347 = vmatpush1.bf16.msra.mxu0 %v1224
    %1348 = vmatprep.subr.bf16.mxu0 0
    %1349 = vmatpush1.bf16.msra.mxu0 %v1225
    %1350 = vmatprep.subr.bf16.mxu0 0
    %1351 = vmatpush1.bf16.msra.mxu0 0
    %1352 = vmatprep.subr.bf16.mxu0 0
    %1353 = vmatpush1.bf16.msra.mxu0 0
    %1354 = vmatprep.subr.bf16.mxu0 0
    %1355 = vmatpush1.bf16.msra.mxu0 0
    %1356 = vmatprep.subr.bf16.mxu0 0
    %1357 = vmatpush1.bf16.msra.mxu0 0
    %1358 = vmatprep.subr.bf16.mxu0 0
    %1359 = vmatpush1.bf16.msra.mxu0 0
    %1360 = vmatprep.subr.bf16.mxu0 0
    %1361 = vmatpush1.bf16.msra.mxu0 0
    %1362 = vmatprep.subr.bf16.mxu0 0
    %1363 = vmatpush1.bf16.msra.mxu0 0
    %1364 = vmatprep.subr.bf16.mxu0 0
    %1365 = vmatpush1.bf16.msra.mxu0 0
    %1366 = vmatprep.subr.bf16.mxu0 0
    %1367 = vmatpush1.bf16.msra.mxu0 0
    %1368 = vmatprep.subr.bf16.mxu0 0
    %1369 = vmatpush1.bf16.msra.mxu0 0
    %1370 = vmatprep.subr.bf16.mxu0 0
    %1371 = vmatpush1.bf16.msra.mxu0 0
    %1372 = vmatprep.subr.bf16.mxu0 0
    %1373 = vmatpush1.bf16.msra.mxu0 0
    %1374 = vmatprep.subr.bf16.mxu0 0
    %1375 = vmatpush1.bf16.msra.mxu0 0
    %1376 = vmatprep.subr.bf16.mxu0 0
    %1377 = vmatpush1.bf16.msra.mxu0 0
    %1378 = vmatprep.mubr.bf16.mxu0 0
    %1379 = vmatmul.mubr.bf16.gmra.mrb[0].mxu0 %v1344
    %v1380 = vpop.f32.mrb[0].mxu0
    %v1381 = vadd.f32 0.0, %v1380
    %v1382 = vpop.f32.mrb[0].mxu0
    %v1383 = vpop.f32.mrb[0].mxu0
    %v1384 = vpop.f32.mrb[0].mxu0
    %1385 = vdwg.mxu0
    %v1387 = vrot.slane %v1381, 7
    %v1390 = vadd.f32 %v1206, %v1387
    %v1391 = vadd.f32 %v1209, %v1381
    %v1392 = vxor.u32 %v1390, 2147483648
    %v1393 = vxor.u32 %v1391, 2147483648
    %v1394 = vmul.f32 %v1392, 1.442695
    %v1395 = vpow.pop %v1394
    %v1396 = vmul.f32 %v1393, 1.442695
    %v1397 = vpow.pop %v1396
    %v1398 = vadd.f32 %v1395, 1.0
    %v1399 = vadd.f32 %v1397, 1.0
    %v1400 = vrcp.pop %v1398
    %v1401 = vmul.f32 1.0, %v1400
    %v1402 = vrcp.pop %v1399
    %v1403 = vmul.f32 1.0, %v1402
    %v1404 = vtanh.pop %v1390
    %v1405 = vtanh.pop %v1391
    %v1408 = vrot.slane %v1308, 7
    %v1409 = vrot.slane %v1309, 7
    %v1412 = vmul.f32 %v1401, %v1408
    %v1413 = vmul.f32 %v1403, %v1409
    %1416 = vrot.lane.b32.xlu0 %v1404, 64
    %v1417 = vpop.permute.xlu0 %1416
    %1418 = vrot.lane.b32.xlu0 %v1405, 64
    %v1419 = vpop.permute.xlu0 %1418
    %v1422 = vmul.f32 %v1401, %v1417
    %v1423 = vmul.f32 %v1403, %v1419
    %1426 = vrot.lane.b32.xlu0 %v1422, 32
    %v1427 = vpop.permute.xlu0 %1426
    %1428 = vrot.lane.b32.xlu0 %v1423, 32
    %v1429 = vpop.permute.xlu0 %1428
    %v1432 = vadd.f32 %v1412, %v1427
    %v1433 = vadd.f32 %v1413, %v1429
    %v1434 = vtanh.pop %v1432
    %v1435 = vtanh.pop %v1433
    %1438 = vrot.lane.b32.xlu0 %v1434, 64
    %v1439 = vpop.permute.xlu0 %1438
    %1440 = vrot.lane.b32.xlu0 %v1435, 64
    %v1441 = vpop.permute.xlu0 %1440
    %v1444 = vmul.f32 %v1401, %v1439
    %v1445 = vmul.f32 %v1403, %v1441
    %1448 = vrot.lane.b32.xlu0 %v1444, 32
    %v1449 = vpop.permute.xlu0 %1448
    %1450 = vrot.lane.b32.xlu0 %v1445, 32
    %v1451 = vpop.permute.xlu0 %1450
    %1454 = vst.msk [vmem:[#allocation3] sm:$0x2] %vm378, %v1449
    %1455 = vst.msk [vmem:[#allocation3 + $0x8] sm:$0x2] %vm378, %v1451
    %v1456 = vpack.c.bf16 %v1444, %v1444
    %v1457 = vpack.c.bf16 %v1445, %v1445
    %v1460 = vunpack.c.l.b16 %v1456
    %v1461 = vunpack.c.l.b16 %v1457
    %v1462 = vrot.slane %v1460, 1
    %v1463 = vsel %vm262, %v1461, %v1462
    %v1464 = vpack.c.b16 %v1463, %v1463
    %1465 = vrot.lane.b32.xlu0 %v1464, 32
    %v1466 = vpop.permute.xlu0 %1465
    %v1468 = vsel %vm146, %v1466, 0
    %1470 = vmatprep.subr.bf16.mxu0 0
    %1471 = vmatpush1.bf16.msra.mxu0 %v1224
    %1472 = vmatprep.subr.bf16.mxu0 0
    %1473 = vmatpush1.bf16.msra.mxu0 %v1225
    %1474 = vmatprep.subr.bf16.mxu0 0
    %1475 = vmatpush1.bf16.msra.mxu0 0
    %1476 = vmatprep.subr.bf16.mxu0 0
    %1477 = vmatpush1.bf16.msra.mxu0 0
    %1478 = vmatprep.subr.bf16.mxu0 0
    %1479 = vmatpush1.bf16.msra.mxu0 0
    %1480 = vmatprep.subr.bf16.mxu0 0
    %1481 = vmatpush1.bf16.msra.mxu0 0
    %1482 = vmatprep.subr.bf16.mxu0 0
    %1483 = vmatpush1.bf16.msra.mxu0 0
    %1484 = vmatprep.subr.bf16.mxu0 0
    %1485 = vmatpush1.bf16.msra.mxu0 0
    %1486 = vmatprep.subr.bf16.mxu0 0
    %1487 = vmatpush1.bf16.msra.mxu0 0
    %1488 = vmatprep.subr.bf16.mxu0 0
    %1489 = vmatpush1.bf16.msra.mxu0 0
    %1490 = vmatprep.subr.bf16.mxu0 0
    %1491 = vmatpush1.bf16.msra.mxu0 0
    %1492 = vmatprep.subr.bf16.mxu0 0
    %1493 = vmatpush1.bf16.msra.mxu0 0
    %1494 = vmatprep.subr.bf16.mxu0 0
    %1495 = vmatpush1.bf16.msra.mxu0 0
    %1496 = vmatprep.subr.bf16.mxu0 0
    %1497 = vmatpush1.bf16.msra.mxu0 0
    %1498 = vmatprep.subr.bf16.mxu0 0
    %1499 = vmatpush1.bf16.msra.mxu0 0
    %1500 = vmatprep.subr.bf16.mxu0 0
    %1501 = vmatpush1.bf16.msra.mxu0 0
    %1502 = vmatprep.mubr.bf16.mxu0 0
    %1503 = vmatmul.mubr.bf16.gmra.mrb[0].mxu0 %v1468
    %v1504 = vpop.f32.mrb[0].mxu0
    %v1505 = vadd.f32 0.0, %v1504
    %v1506 = vpop.f32.mrb[0].mxu0
    %v1507 = vpop.f32.mrb[0].mxu0
    %v1508 = vpop.f32.mrb[0].mxu0
    %1509 = vdwg.mxu0
    %v1511 = vrot.slane %v1505, 6
    %v1512 = vrot.slane %v1505, 7
    %v1515 = vadd.f32 %v1206, %v1511
    %v1516 = vadd.f32 %v1209, %v1512
    %v1517 = vxor.u32 %v1515, 2147483648
    %v1518 = vxor.u32 %v1516, 2147483648
    %v1519 = vmul.f32 %v1517, 1.442695
    %v1520 = vpow.pop %v1519
    %v1521 = vmul.f32 %v1518, 1.442695
    %v1522 = vpow.pop %v1521
    %v1523 = vadd.f32 %v1520, 1.0
    %v1524 = vadd.f32 %v1522, 1.0
    %v1525 = vrcp.pop %v1523
    %v1526 = vmul.f32 1.0, %v1525
    %v1527 = vrcp.pop %v1524
    %v1528 = vmul.f32 1.0, %v1527
    %v1529 = vtanh.pop %v1515
    %v1530 = vtanh.pop %v1516
    %v1533 = vrot.slane %v1432, 7
    %v1534 = vrot.slane %v1433, 7
    %v1537 = vmul.f32 %v1526, %v1533
    %v1538 = vmul.f32 %v1528, %v1534
    %1541 = vrot.lane.b32.xlu0 %v1529, 64
    %v1542 = vpop.permute.xlu0 %1541
    %1543 = vrot.lane.b32.xlu0 %v1530, 64
    %v1544 = vpop.permute.xlu0 %1543
    %v1547 = vmul.f32 %v1526, %v1542
    %v1548 = vmul.f32 %v1528, %v1544
    %1551 = vrot.lane.b32.xlu0 %v1547, 32
    %v1552 = vpop.permute.xlu0 %1551
    %1553 = vrot.lane.b32.xlu0 %v1548, 32
    %v1554 = vpop.permute.xlu0 %1553
    %v1557 = vadd.f32 %v1537, %v1552
    %v1558 = vadd.f32 %v1538, %v1554
    %v1559 = vtanh.pop %v1557
    %v1560 = vtanh.pop %v1558
    %1563 = vrot.lane.b32.xlu0 %v1559, 64
    %v1564 = vpop.permute.xlu0 %1563
    %1565 = vrot.lane.b32.xlu0 %v1560, 64
    %v1566 = vpop.permute.xlu0 %1565
    %v1569 = vmul.f32 %v1526, %v1564
    %v1570 = vmul.f32 %v1528, %v1566
    %1573 = vrot.lane.b32.xlu0 %v1569, 32
    %v1574 = vpop.permute.xlu0 %1573
    %1575 = vrot.lane.b32.xlu0 %v1570, 32
    %v1576 = vpop.permute.xlu0 %1575
    %1579 = vst.msk [vmem:[#allocation3] sm:$0x4] %vm504, %v1574
    %1580 = vst.msk [vmem:[#allocation3 + $0x8] sm:$0x4] %vm504, %v1576
    %v1581 = vpack.c.bf16 %v1569, %v1569
    %v1582 = vpack.c.bf16 %v1570, %v1570
    %v1585 = vunpack.c.l.b16 %v1581
    %v1586 = vunpack.c.l.b16 %v1582
    %v1587 = vrot.slane %v1585, 2
    %v1588 = vrot.slane %v1586, 1
    %v1589 = vsel %vm262, %v1588, %v1587
    %v1590 = vpack.c.b16 %v1589, %v1589
    %1591 = vrot.lane.b32.xlu0 %v1590, 32
    %v1592 = vpop.permute.xlu0 %1591
    %v1594 = vsel %vm146, %v1592, 0
    %1596 = vmatprep.subr.bf16.mxu0 0
    %1597 = vmatpush1.bf16.msra.mxu0 %v1224
    %1598 = vmatprep.subr.bf16.mxu0 0
    %1599 = vmatpush1.bf16.msra.mxu0 %v1225
    %1600 = vmatprep.subr.bf16.mxu0 0
    %1601 = vmatpush1.bf16.msra.mxu0 0
    %1602 = vmatprep.subr.bf16.mxu0 0
    %1603 = vmatpush1.bf16.msra.mxu0 0
    %1604 = vmatprep.subr.bf16.mxu0 0
    %1605 = vmatpush1.bf16.msra.mxu0 0
    %1606 = vmatprep.subr.bf16.mxu0 0
    %1607 = vmatpush1.bf16.msra.mxu0 0
    %1608 = vmatprep.subr.bf16.mxu0 0
    %1609 = vmatpush1.bf16.msra.mxu0 0
    %1610 = vmatprep.subr.bf16.mxu0 0
    %1611 = vmatpush1.bf16.msra.mxu0 0
    %1612 = vmatprep.subr.bf16.mxu0 0
    %1613 = vmatpush1.bf16.msra.mxu0 0
    %1614 = vmatprep.subr.bf16.mxu0 0
    %1615 = vmatpush1.bf16.msra.mxu0 0
    %1616 = vmatprep.subr.bf16.mxu0 0
    %1617 = vmatpush1.bf16.msra.mxu0 0
    %1618 = vmatprep.subr.bf16.mxu0 0
    %1619 = vmatpush1.bf16.msra.mxu0 0
    %1620 = vmatprep.subr.bf16.mxu0 0
    %1621 = vmatpush1.bf16.msra.mxu0 0
    %1622 = vmatprep.subr.bf16.mxu0 0
    %1623 = vmatpush1.bf16.msra.mxu0 0
    %1624 = vmatprep.subr.bf16.mxu0 0
    %1625 = vmatpush1.bf16.msra.mxu0 0
    %1626 = vmatprep.subr.bf16.mxu0 0
    %1627 = vmatpush1.bf16.msra.mxu0 0
    %1628 = vmatprep.mubr.bf16.mxu0 0
    %1629 = vmatmul.mubr.bf16.gmra.mrb[0].mxu0 %v1594
    %v1630 = vpop.f32.mrb[0].mxu0
    %v1631 = vadd.f32 0.0, %v1630
    %v1632 = vpop.f32.mrb[0].mxu0
    %v1633 = vpop.f32.mrb[0].mxu0
    %v1634 = vpop.f32.mrb[0].mxu0
    %1635 = vdwg.mxu0
    %v1637 = vrot.slane %v1631, 5
    %v1638 = vrot.slane %v1631, 6
    %v1641 = vadd.f32 %v1206, %v1637
    %v1642 = vadd.f32 %v1209, %v1638
    %v1643 = vxor.u32 %v1641, 2147483648
    %v1644 = vxor.u32 %v1642, 2147483648
    %v1645 = vmul.f32 %v1643, 1.442695
    %v1646 = vpow.pop %v1645
    %v1647 = vmul.f32 %v1644, 1.442695
    %v1648 = vpow.pop %v1647
    %v1649 = vadd.f32 %v1646, 1.0
    %v1650 = vadd.f32 %v1648, 1.0
    %v1651 = vrcp.pop %v1649
    %v1652 = vmul.f32 1.0, %v1651
    %v1653 = vrcp.pop %v1650
    %v1654 = vmul.f32 1.0, %v1653
    %v1655 = vtanh.pop %v1641
    %v1656 = vtanh.pop %v1642
    %v1659 = vrot.slane %v1557, 7
    %v1660 = vrot.slane %v1558, 7
    %v1663 = vmul.f32 %v1652, %v1659
    %v1664 = vmul.f32 %v1654, %v1660
    %1667 = vrot.lane.b32.xlu0 %v1655, 64
    %v1668 = vpop.permute.xlu0 %1667
    %1669 = vrot.lane.b32.xlu0 %v1656, 64
    %v1670 = vpop.permute.xlu0 %1669
    %v1673 = vmul.f32 %v1652, %v1668
    %v1674 = vmul.f32 %v1654, %v1670
    %1677 = vrot.lane.b32.xlu0 %v1673, 32
    %v1678 = vpop.permute.xlu0 %1677
    %1679 = vrot.lane.b32.xlu0 %v1674, 32
    %v1680 = vpop.permute.xlu0 %1679
    %v1683 = vadd.f32 %v1663, %v1678
    %v1684 = vadd.f32 %v1664, %v1680
    %v1685 = vtanh.pop %v1683
    %v1686 = vtanh.pop %v1684
    %1689 = vrot.lane.b32.xlu0 %v1685, 64
    %v1690 = vpop.permute.xlu0 %1689
    %1691 = vrot.lane.b32.xlu0 %v1686, 64
    %v1692 = vpop.permute.xlu0 %1691
    %v1695 = vmul.f32 %v1652, %v1690
    %v1696 = vmul.f32 %v1654, %v1692
    %1699 = vrot.lane.b32.xlu0 %v1695, 32
    %v1700 = vpop.permute.xlu0 %1699
    %1701 = vrot.lane.b32.xlu0 %v1696, 32
    %v1702 = vpop.permute.xlu0 %1701
    %1705 = vst.msk [vmem:[#allocation3] sm:$0x8] %vm631, %v1700
    %1706 = vst.msk [vmem:[#allocation3 + $0x8] sm:$0x8] %vm631, %v1702
    %v1707 = vpack.c.bf16 %v1695, %v1695
    %v1708 = vpack.c.bf16 %v1696, %v1696
    %v1711 = vunpack.c.l.b16 %v1707
    %v1712 = vunpack.c.l.b16 %v1708
    %v1713 = vrot.slane %v1711, 3
    %v1714 = vrot.slane %v1712, 2
    %v1715 = vsel %vm262, %v1714, %v1713
    %v1716 = vpack.c.b16 %v1715, %v1715
    %1717 = vrot.lane.b32.xlu0 %v1716, 32
    %v1718 = vpop.permute.xlu0 %1717
    %v1720 = vsel %vm146, %v1718, 0
    %1722 = vmatprep.subr.bf16.mxu0 0
    %1723 = vmatpush1.bf16.msra.mxu0 %v1224
    %1724 = vmatprep.subr.bf16.mxu0 0
    %1725 = vmatpush1.bf16.msra.mxu0 %v1225
    %1726 = vmatprep.subr.bf16.mxu0 0
    %1727 = vmatpush1.bf16.msra.mxu0 0
    %1728 = vmatprep.subr.bf16.mxu0 0
    %1729 = vmatpush1.bf16.msra.mxu0 0
    %1730 = vmatprep.subr.bf16.mxu0 0
    %1731 = vmatpush1.bf16.msra.mxu0 0
    %1732 = vmatprep.subr.bf16.mxu0 0
    %1733 = vmatpush1.bf16.msra.mxu0 0
    %1734 = vmatprep.subr.bf16.mxu0 0
    %1735 = vmatpush1.bf16.msra.mxu0 0
    %1736 = vmatprep.subr.bf16.mxu0 0
    %1737 = vmatpush1.bf16.msra.mxu0 0
    %1738 = vmatprep.subr.bf16.mxu0 0
    %1739 = vmatpush1.bf16.msra.mxu0 0
    %1740 = vmatprep.subr.bf16.mxu0 0
    %1741 = vmatpush1.bf16.msra.mxu0 0
    %1742 = vmatprep.subr.bf16.mxu0 0
    %1743 = vmatpush1.bf16.msra.mxu0 0
    %1744 = vmatprep.subr.bf16.mxu0 0
    %1745 = vmatpush1.bf16.msra.mxu0 0
    %1746 = vmatprep.subr.bf16.mxu0 0
    %1747 = vmatpush1.bf16.msra.mxu0 0
    %1748 = vmatprep.subr.bf16.mxu0 0
    %1749 = vmatpush1.bf16.msra.mxu0 0
    %1750 = vmatprep.subr.bf16.mxu0 0
    %1751 = vmatpush1.bf16.msra.mxu0 0
    %1752 = vmatprep.subr.bf16.mxu0 0
    %1753 = vmatpush1.bf16.msra.mxu0 0
    %1754 = vmatprep.mubr.bf16.mxu0 0
    %1755 = vmatmul.mubr.bf16.gmra.mrb[0].mxu0 %v1720
    %v1756 = vpop.f32.mrb[0].mxu0
    %v1757 = vadd.f32 0.0, %v1756
    %v1758 = vpop.f32.mrb[0].mxu0
    %v1759 = vpop.f32.mrb[0].mxu0
    %v1760 = vpop.f32.mrb[0].mxu0
    %1761 = vdwg.mxu0
    %v1763 = vrot.slane %v1757, 4
    %v1764 = vrot.slane %v1757, 5
    %v1767 = vadd.f32 %v1206, %v1763
    %v1768 = vadd.f32 %v1209, %v1764
    %v1769 = vxor.u32 %v1767, 2147483648
    %v1770 = vxor.u32 %v1768, 2147483648
    %v1771 = vmul.f32 %v1769, 1.442695
    %v1772 = vpow.pop %v1771
    %v1773 = vmul.f32 %v1770, 1.442695
    %v1774 = vpow.pop %v1773
    %v1775 = vadd.f32 %v1772, 1.0
    %v1776 = vadd.f32 %v1774, 1.0
    %v1777 = vrcp.pop %v1775
    %v1778 = vmul.f32 1.0, %v1777
    %v1779 = vrcp.pop %v1776
    %v1780 = vmul.f32 1.0, %v1779
    %v1781 = vtanh.pop %v1767
    %v1782 = vtanh.pop %v1768
    %v1785 = vrot.slane %v1683, 7
    %v1786 = vrot.slane %v1684, 7
    %v1789 = vmul.f32 %v1778, %v1785
    %v1790 = vmul.f32 %v1780, %v1786
    %1793 = vrot.lane.b32.xlu0 %v1781, 64
    %v1794 = vpop.permute.xlu0 %1793
    %1795 = vrot.lane.b32.xlu0 %v1782, 64
    %v1796 = vpop.permute.xlu0 %1795
    %v1799 = vmul.f32 %v1778, %v1794
    %v1800 = vmul.f32 %v1780, %v1796
    %1803 = vrot.lane.b32.xlu0 %v1799, 32
    %v1804 = vpop.permute.xlu0 %1803
    %1805 = vrot.lane.b32.xlu0 %v1800, 32
    %v1806 = vpop.permute.xlu0 %1805
    %v1809 = vadd.f32 %v1789, %v1804
    %v1810 = vadd.f32 %v1790, %v1806
    %v1811 = vtanh.pop %v1809
    %v1812 = vtanh.pop %v1810
    %1815 = vrot.lane.b32.xlu0 %v1811, 64
    %v1816 = vpop.permute.xlu0 %1815
    %1817 = vrot.lane.b32.xlu0 %v1812, 64
    %v1818 = vpop.permute.xlu0 %1817
    %v1821 = vmul.f32 %v1778, %v1816
    %v1822 = vmul.f32 %v1780, %v1818
    %1825 = vrot.lane.b32.xlu0 %v1821, 32
    %v1826 = vpop.permute.xlu0 %1825
    %1827 = vrot.lane.b32.xlu0 %v1822, 32
    %v1828 = vpop.permute.xlu0 %1827
    %1831 = vst.msk [vmem:[#allocation3] sm:$0x10] %vm758, %v1826
    %1832 = vst.msk [vmem:[#allocation3 + $0x8] sm:$0x10] %vm758, %v1828
    %v1833 = vpack.c.bf16 %v1821, %v1821
    %v1834 = vpack.c.bf16 %v1822, %v1822
    %v1837 = vunpack.c.l.b16 %v1833
    %v1838 = vunpack.c.l.b16 %v1834
    %v1839 = vrot.slane %v1837, 4
    %v1840 = vrot.slane %v1838, 3
    %v1841 = vsel %vm262, %v1840, %v1839
    %v1842 = vpack.c.b16 %v1841, %v1841
    %1843 = vrot.lane.b32.xlu0 %v1842, 32
    %v1844 = vpop.permute.xlu0 %1843
    %v1846 = vsel %vm146, %v1844, 0
    %1848 = vmatprep.subr.bf16.mxu0 0
    %1849 = vmatpush1.bf16.msra.mxu0 %v1224
    %1850 = vmatprep.subr.bf16.mxu0 0
    %1851 = vmatpush1.bf16.msra.mxu0 %v1225
    %1852 = vmatprep.subr.bf16.mxu0 0
    %1853 = vmatpush1.bf16.msra.mxu0 0
    %1854 = vmatprep.subr.bf16.mxu0 0
    %1855 = vmatpush1.bf16.msra.mxu0 0
    %1856 = vmatprep.subr.bf16.mxu0 0
    %1857 = vmatpush1.bf16.msra.mxu0 0
    %1858 = vmatprep.subr.bf16.mxu0 0
    %1859 = vmatpush1.bf16.msra.mxu0 0
    %1860 = vmatprep.subr.bf16.mxu0 0
    %1861 = vmatpush1.bf16.msra.mxu0 0
    %1862 = vmatprep.subr.bf16.mxu0 0
    %1863 = vmatpush1.bf16.msra.mxu0 0
    %1864 = vmatprep.subr.bf16.mxu0 0
    %1865 = vmatpush1.bf16.msra.mxu0 0
    %1866 = vmatprep.subr.bf16.mxu0 0
    %1867 = vmatpush1.bf16.msra.mxu0 0
    %1868 = vmatprep.subr.bf16.mxu0 0
    %1869 = vmatpush1.bf16.msra.mxu0 0
    %1870 = vmatprep.subr.bf16.mxu0 0
    %1871 = vmatpush1.bf16.msra.mxu0 0
    %1872 = vmatprep.subr.bf16.mxu0 0
    %1873 = vmatpush1.bf16.msra.mxu0 0
    %1874 = vmatprep.subr.bf16.mxu0 0
    %1875 = vmatpush1.bf16.msra.mxu0 0
    %1876 = vmatprep.subr.bf16.mxu0 0
    %1877 = vmatpush1.bf16.msra.mxu0 0
    %1878 = vmatprep.subr.bf16.mxu0 0
    %1879 = vmatpush1.bf16.msra.mxu0 0
    %1880 = vmatprep.mubr.bf16.mxu0 0
    %1881 = vmatmul.mubr.bf16.gmra.mrb[0].mxu0 %v1846
    %v1882 = vpop.f32.mrb[0].mxu0
    %v1883 = vadd.f32 0.0, %v1882
    %v1884 = vpop.f32.mrb[0].mxu0
    %v1885 = vpop.f32.mrb[0].mxu0
    %v1886 = vpop.f32.mrb[0].mxu0
    %1887 = vdwg.mxu0
    %v1889 = vrot.slane %v1883, 3
    %v1890 = vrot.slane %v1883, 4
    %v1893 = vadd.f32 %v1206, %v1889
    %v1894 = vadd.f32 %v1209, %v1890
    %v1895 = vxor.u32 %v1893, 2147483648
    %v1896 = vxor.u32 %v1894, 2147483648
    %v1897 = vmul.f32 %v1895, 1.442695
    %v1898 = vpow.pop %v1897
    %v1899 = vmul.f32 %v1896, 1.442695
    %v1900 = vpow.pop %v1899
    %v1901 = vadd.f32 %v1898, 1.0
    %v1902 = vadd.f32 %v1900, 1.0
    %v1903 = vrcp.pop %v1901
    %v1904 = vmul.f32 1.0, %v1903
    %v1905 = vrcp.pop %v1902
    %v1906 = vmul.f32 1.0, %v1905
    %v1907 = vtanh.pop %v1893
    %v1908 = vtanh.pop %v1894
    %v1911 = vrot.slane %v1809, 7
    %v1912 = vrot.slane %v1810, 7
    %v1915 = vmul.f32 %v1904, %v1911
    %v1916 = vmul.f32 %v1906, %v1912
    %1919 = vrot.lane.b32.xlu0 %v1907, 64
    %v1920 = vpop.permute.xlu0 %1919
    %1921 = vrot.lane.b32.xlu0 %v1908, 64
    %v1922 = vpop.permute.xlu0 %1921
    %v1925 = vmul.f32 %v1904, %v1920
    %v1926 = vmul.f32 %v1906, %v1922
    %1929 = vrot.lane.b32.xlu0 %v1925, 32
    %v1930 = vpop.permute.xlu0 %1929
    %1931 = vrot.lane.b32.xlu0 %v1926, 32
    %v1932 = vpop.permute.xlu0 %1931
    %v1935 = vadd.f32 %v1915, %v1930
    %v1936 = vadd.f32 %v1916, %v1932
    %v1937 = vtanh.pop %v1935
    %v1938 = vtanh.pop %v1936
    %1941 = vrot.lane.b32.xlu0 %v1937, 64
    %v1942 = vpop.permute.xlu0 %1941
    %1943 = vrot.lane.b32.xlu0 %v1938, 64
    %v1944 = vpop.permute.xlu0 %1943
    %v1947 = vmul.f32 %v1904, %v1942
    %v1948 = vmul.f32 %v1906, %v1944
    %1951 = vrot.lane.b32.xlu0 %v1947, 32
    %v1952 = vpop.permute.xlu0 %1951
    %1953 = vrot.lane.b32.xlu0 %v1948, 32
    %v1954 = vpop.permute.xlu0 %1953
    %1957 = vst.msk [vmem:[#allocation3] sm:$0x20] %vm885, %v1952
    %1958 = vst.msk [vmem:[#allocation3 + $0x8] sm:$0x20] %vm885, %v1954
    %v1959 = vpack.c.bf16 %v1947, %v1947
    %v1960 = vpack.c.bf16 %v1948, %v1948
    %v1963 = vunpack.c.l.b16 %v1959
    %v1964 = vunpack.c.l.b16 %v1960
    %v1965 = vrot.slane %v1963, 5
    %v1966 = vrot.slane %v1964, 4
    %v1967 = vsel %vm262, %v1966, %v1965
    %v1968 = vpack.c.b16 %v1967, %v1967
    %1969 = vrot.lane.b32.xlu0 %v1968, 32
    %v1970 = vpop.permute.xlu0 %1969
    %v1972 = vsel %vm146, %v1970, 0
    %1974 = vmatprep.subr.bf16.mxu0 0
    %1975 = vmatpush1.bf16.msra.mxu0 %v1224
    %1976 = vmatprep.subr.bf16.mxu0 0
    %1977 = vmatpush1.bf16.msra.mxu0 %v1225
    %1978 = vmatprep.subr.bf16.mxu0 0
    %1979 = vmatpush1.bf16.msra.mxu0 0
    %1980 = vmatprep.subr.bf16.mxu0 0
    %1981 = vmatpush1.bf16.msra.mxu0 0
    %1982 = vmatprep.subr.bf16.mxu0 0
    %1983 = vmatpush1.bf16.msra.mxu0 0
    %1984 = vmatprep.subr.bf16.mxu0 0
    %1985 = vmatpush1.bf16.msra.mxu0 0
    %1986 = vmatprep.subr.bf16.mxu0 0
    %1987 = vmatpush1.bf16.msra.mxu0 0
    %1988 = vmatprep.subr.bf16.mxu0 0
    %1989 = vmatpush1.bf16.msra.mxu0 0
    %1990 = vmatprep.subr.bf16.mxu0 0
    %1991 = vmatpush1.bf16.msra.mxu0 0
    %1992 = vmatprep.subr.bf16.mxu0 0
    %1993 = vmatpush1.bf16.msra.mxu0 0
    %1994 = vmatprep.subr.bf16.mxu0 0
    %1995 = vmatpush1.bf16.msra.mxu0 0
    %1996 = vmatprep.subr.bf16.mxu0 0
    %1997 = vmatpush1.bf16.msra.mxu0 0
    %1998 = vmatprep.subr.bf16.mxu0 0
    %1999 = vmatpush1.bf16.msra.mxu0 0
    %2000 = vmatprep.subr.bf16.mxu0 0
    %2001 = vmatpush1.bf16.msra.mxu0 0
    %2002 = vmatprep.subr.bf16.mxu0 0
    %2003 = vmatpush1.bf16.msra.mxu0 0
    %2004 = vmatprep.subr.bf16.mxu0 0
    %2005 = vmatpush1.bf16.msra.mxu0 0
    %2006 = vmatprep.mubr.bf16.mxu0 0
    %2007 = vmatmul.mubr.bf16.gmra.mrb[0].mxu0 %v1972
    %v2008 = vpop.f32.mrb[0].mxu0
    %v2009 = vadd.f32 0.0, %v2008
    %v2010 = vpop.f32.mrb[0].mxu0
    %v2011 = vpop.f32.mrb[0].mxu0
    %v2012 = vpop.f32.mrb[0].mxu0
    %2013 = vdwg.mxu0
    %v2015 = vrot.slane %v2009, 2
    %v2016 = vrot.slane %v2009, 3
    %v2019 = vadd.f32 %v1206, %v2015
    %v2020 = vadd.f32 %v1209, %v2016
    %v2021 = vxor.u32 %v2019, 2147483648
    %v2022 = vxor.u32 %v2020, 2147483648
    %v2023 = vmul.f32 %v2021, 1.442695
    %v2024 = vpow.pop %v2023
    %v2025 = vmul.f32 %v2022, 1.442695
    %v2026 = vpow.pop %v2025
    %v2027 = vadd.f32 %v2024, 1.0
    %v2028 = vadd.f32 %v2026, 1.0
    %v2029 = vrcp.pop %v2027
    %v2030 = vmul.f32 1.0, %v2029
    %v2031 = vrcp.pop %v2028
    %v2032 = vmul.f32 1.0, %v2031
    %v2033 = vtanh.pop %v2019
    %v2034 = vtanh.pop %v2020
    %v2037 = vrot.slane %v1935, 7
    %v2038 = vrot.slane %v1936, 7
    %v2041 = vmul.f32 %v2030, %v2037
    %v2042 = vmul.f32 %v2032, %v2038
    %2045 = vrot.lane.b32.xlu0 %v2033, 64
    %v2046 = vpop.permute.xlu0 %2045
    %2047 = vrot.lane.b32.xlu0 %v2034, 64
    %v2048 = vpop.permute.xlu0 %2047
    %v2051 = vmul.f32 %v2030, %v2046
    %v2052 = vmul.f32 %v2032, %v2048
    %2055 = vrot.lane.b32.xlu0 %v2051, 32
    %v2056 = vpop.permute.xlu0 %2055
    %2057 = vrot.lane.b32.xlu0 %v2052, 32
    %v2058 = vpop.permute.xlu0 %2057
    %v2061 = vadd.f32 %v2041, %v2056
    %v2062 = vadd.f32 %v2042, %v2058
    %v2063 = vtanh.pop %v2061
    %v2064 = vtanh.pop %v2062
    %2067 = vrot.lane.b32.xlu0 %v2063, 64
    %v2068 = vpop.permute.xlu0 %2067
    %2069 = vrot.lane.b32.xlu0 %v2064, 64
    %v2070 = vpop.permute.xlu0 %2069
    %v2073 = vmul.f32 %v2030, %v2068
    %v2074 = vmul.f32 %v2032, %v2070
    %2077 = vrot.lane.b32.xlu0 %v2073, 32
    %v2078 = vpop.permute.xlu0 %2077
    %2079 = vrot.lane.b32.xlu0 %v2074, 32
    %v2080 = vpop.permute.xlu0 %2079
    %2083 = vst.msk [vmem:[#allocation3] sm:$0x40] %vm1012, %v2078
    %2084 = vst.msk [vmem:[#allocation3 + $0x8] sm:$0x40] %vm1012, %v2080
    %v2085 = vpack.c.bf16 %v2073, %v2073
    %v2086 = vpack.c.bf16 %v2074, %v2074
    %v2089 = vunpack.c.l.b16 %v2085
    %v2090 = vunpack.c.l.b16 %v2086
    %v2091 = vrot.slane %v2089, 6
    %v2092 = vrot.slane %v2090, 5
    %v2093 = vsel %vm262, %v2092, %v2091
    %v2094 = vpack.c.b16 %v2093, %v2093
    %2095 = vrot.lane.b32.xlu0 %v2094, 32
    %v2096 = vpop.permute.xlu0 %2095
    %v2098 = vsel %vm146, %v2096, 0
    %2100 = vmatprep.subr.bf16.mxu0 0
    %2101 = vmatpush1.bf16.msra.mxu0 %v1224
    %2102 = vmatprep.subr.bf16.mxu0 0
    %2103 = vmatpush1.bf16.msra.mxu0 %v1225
    %2104 = vmatprep.subr.bf16.mxu0 0
    %2105 = vmatpush1.bf16.msra.mxu0 0
    %2106 = vmatprep.subr.bf16.mxu0 0
    %2107 = vmatpush1.bf16.msra.mxu0 0
    %2108 = vmatprep.subr.bf16.mxu0 0
    %2109 = vmatpush1.bf16.msra.mxu0 0
    %2110 = vmatprep.subr.bf16.mxu0 0
    %2111 = vmatpush1.bf16.msra.mxu0 0
    %2112 = vmatprep.subr.bf16.mxu0 0
    %2113 = vmatpush1.bf16.msra.mxu0 0
    %2114 = vmatprep.subr.bf16.mxu0 0
    %2115 = vmatpush1.bf16.msra.mxu0 0
    %2116 = vmatprep.subr.bf16.mxu0 0
    %2117 = vmatpush1.bf16.msra.mxu0 0
    %2118 = vmatprep.subr.bf16.mxu0 0
    %2119 = vmatpush1.bf16.msra.mxu0 0
    %2120 = vmatprep.subr.bf16.mxu0 0
    %2121 = vmatpush1.bf16.msra.mxu0 0
    %2122 = vmatprep.subr.bf16.mxu0 0
    %2123 = vmatpush1.bf16.msra.mxu0 0
    %2124 = vmatprep.subr.bf16.mxu0 0
    %2125 = vmatpush1.bf16.msra.mxu0 0
    %2126 = vmatprep.subr.bf16.mxu0 0
    %2127 = vmatpush1.bf16.msra.mxu0 0
    %2128 = vmatprep.subr.bf16.mxu0 0
    %2129 = vmatpush1.bf16.msra.mxu0 0
    %2130 = vmatprep.subr.bf16.mxu0 0
    %2131 = vmatpush1.bf16.msra.mxu0 0
    %2132 = vmatprep.mubr.bf16.mxu0 0
    %2133 = vmatmul.mubr.bf16.gmra.mrb[0].mxu0 %v2098
    %v2134 = vpop.f32.mrb[0].mxu0
    %v2135 = vadd.f32 0.0, %v2134
    %v2136 = vpop.f32.mrb[0].mxu0
    %v2137 = vpop.f32.mrb[0].mxu0
    %v2138 = vpop.f32.mrb[0].mxu0
    %2139 = vdwg.mxu0
    %v2141 = vrot.slane %v2135, 1
    %v2142 = vrot.slane %v2135, 2
    %v2145 = vadd.f32 %v1206, %v2141
    %v2146 = vadd.f32 %v1209, %v2142
    %v2147 = vxor.u32 %v2145, 2147483648
    %v2148 = vxor.u32 %v2146, 2147483648
    %v2149 = vmul.f32 %v2147, 1.442695
    %v2150 = vpow.pop %v2149
    %v2151 = vmul.f32 %v2148, 1.442695
    %v2152 = vpow.pop %v2151
    %v2153 = vadd.f32 %v2150, 1.0
    %v2154 = vadd.f32 %v2152, 1.0
    %v2155 = vrcp.pop %v2153
    %v2156 = vmul.f32 1.0, %v2155
    %v2157 = vrcp.pop %v2154
    %v2158 = vmul.f32 1.0, %v2157
    %v2159 = vtanh.pop %v2145
    %v2160 = vtanh.pop %v2146
    %v2163 = vrot.slane %v2061, 7
    %v2164 = vrot.slane %v2062, 7
    %v2167 = vmul.f32 %v2156, %v2163
    %v2168 = vmul.f32 %v2158, %v2164
    %2171 = vrot.lane.b32.xlu0 %v2159, 64
    %v2172 = vpop.permute.xlu0 %2171
    %2173 = vrot.lane.b32.xlu0 %v2160, 64
    %v2174 = vpop.permute.xlu0 %2173
    %v2177 = vmul.f32 %v2156, %v2172
    %v2178 = vmul.f32 %v2158, %v2174
    %2181 = vrot.lane.b32.xlu0 %v2177, 32
    %v2182 = vpop.permute.xlu0 %2181
    %2183 = vrot.lane.b32.xlu0 %v2178, 32
    %v2184 = vpop.permute.xlu0 %2183
    %v2187 = vadd.f32 %v2167, %v2182
    %v2188 = vadd.f32 %v2168, %v2184
    %v2189 = vtanh.pop %v2187
    %v2190 = vtanh.pop %v2188
    %2193 = vrot.lane.b32.xlu0 %v2189, 64
    %v2194 = vpop.permute.xlu0 %2193
    %2195 = vrot.lane.b32.xlu0 %v2190, 64
    %v2196 = vpop.permute.xlu0 %2195
    %v2199 = vmul.f32 %v2156, %v2194
    %v2200 = vmul.f32 %v2158, %v2196
    %2203 = vrot.lane.b32.xlu0 %v2199, 32
    %v2204 = vpop.permute.xlu0 %2203
    %2205 = vrot.lane.b32.xlu0 %v2200, 32
    %v2206 = vpop.permute.xlu0 %2205
    %2209 = vst.msk [vmem:[#allocation3] sm:$0x80] %vm1139, %v2204
    %2210 = vst.msk [vmem:[#allocation3 + $0x8] sm:$0x80] %vm1139, %v2206
    %v2211 = vld [vmem:[#allocation3] sm:$0xff]
    %v2212 = vld [vmem:[#allocation3 + $0x8] sm:$0xff]
    %v2213 = vpack.c.bf16 %v2212, %v2211
    %v2214 = vld [vmem:[%s7] sm:$0xf]
    %v2215 = vld [vmem:[%s7 + $0x4] sm:$0xf]
    %v2216 = vld [vmem:[%s7 + $0x8] sm:$0xf]
    %v2217 = vld [vmem:[%s7 + $0xc] sm:$0xf]
    %v2218 = vld [vmem:[%s8] sm:$0x1]
    %v2220 = vlaneseq
    %v2221 = vshrl.u32 %v2220, 7
    %v2222 = vsub.s32 0, %v2221
    %v2223 = vrot.slane %v2218, %v2222
    %v2229 = vunpack.c.l.b16 %v2214
    %v2230 = vunpack.c.l.b16 %v2215
    %v2231 = vunpack.c.l.b16 %v2216
    %v2232 = vunpack.c.l.b16 %v2217
    %v2233 = vpack.c.b16 %v2230, %v2229
    %v2234 = vpack.c.b16 %v2232, %v2231
    %v2238 = vsel %vm146, %v2213, 0
    %2240 = vmatprep.subr.bf16.mxu0 0
    %2241 = vmatpush1.bf16.msra.mxu0 %v2233
    %2242 = vmatprep.subr.bf16.mxu0 0
    %2243 = vmatpush1.bf16.msra.mxu0 %v2234
    %2244 = vmatprep.subr.bf16.mxu0 0
    %2245 = vmatpush1.bf16.msra.mxu0 0
    %2246 = vmatprep.subr.bf16.mxu0 0
    %2247 = vmatpush1.bf16.msra.mxu0 0
    %2248 = vmatprep.subr.bf16.mxu0 0
    %2249 = vmatpush1.bf16.msra.mxu0 0
    %2250 = vmatprep.subr.bf16.mxu0 0
    %2251 = vmatpush1.bf16.msra.mxu0 0
    %2252 = vmatprep.subr.bf16.mxu0 0
    %2253 = vmatpush1.bf16.msra.mxu0 0
    %2254 = vmatprep.subr.bf16.mxu0 0
    %2255 = vmatpush1.bf16.msra.mxu0 0
    %2256 = vmatprep.subr.bf16.mxu0 0
    %2257 = vmatpush1.bf16.msra.mxu0 0
    %2258 = vmatprep.subr.bf16.mxu0 0
    %2259 = vmatpush1.bf16.msra.mxu0 0
    %2260 = vmatprep.subr.bf16.mxu0 0
    %2261 = vmatpush1.bf16.msra.mxu0 0
    %2262 = vmatprep.subr.bf16.mxu0 0
    %2263 = vmatpush1.bf16.msra.mxu0 0
    %2264 = vmatprep.subr.bf16.mxu0 0
    %2265 = vmatpush1.bf16.msra.mxu0 0
    %2266 = vmatprep.subr.bf16.mxu0 0
    %2267 = vmatpush1.bf16.msra.mxu0 0
    %2268 = vmatprep.subr.bf16.mxu0 0
    %2269 = vmatpush1.bf16.msra.mxu0 0
    %2270 = vmatprep.subr.bf16.mxu0 0
    %2271 = vmatpush1.bf16.msra.mxu0 0
    %2272 = vmatprep.mubr.bf16.mxu0 0
    %2273 = vmatmul.mubr.bf16.gmra.mrb[0].mxu0 %v2238
    %v2274 = vpop.f32.mrb[0].mxu0
    %v2275 = vadd.f32 %v2223, %v2274
    %v2276 = vpop.f32.mrb[0].mxu0
    %v2277 = vpop.f32.mrb[0].mxu0
    %v2278 = vadd.f32 %v2223, %v2277
    %v2279 = vpop.f32.mrb[0].mxu0
    %2280 = vdwg.mxu0
    %v2281 = vtanh.pop %v2275
    %v2282 = vtanh.pop %v2278
    %v2283 = vld [vmem:[%s9] sm:$0x1]
    %v2285 = vlaneseq
    %v2286 = vshrl.u32 %v2285, 7
    %v2287 = vsub.s32 0, %v2286
    %v2288 = vrot.slane %v2283, %v2287
    %v2290 = vmul.f32 %v2281, %v2288
    %v2291 = vmul.f32 %v2282, %v2288
    %v2292 = vsel %vm146, %v2290, 0.0
    %2293 = vadd.xlane.f32.xlu0 %v2292
    %v2294 = vpop.xlane.xlu0 %2293
    %v2295 = vsel %vm146, %v2291, 0.0
    %2296 = vadd.xlane.f32.xlu0 %v2295
    %v2297 = vpop.xlane.xlu0 %2296
    %v2298 = vrot.slane %v2294, 4
    %v2299 = vmax.f32 %v2294, %v2298
    %v2300 = vrot.slane %v2299, 2
    %v2301 = vmax.f32 %v2299, %v2300
    %v2302 = vrot.slane %v2301, 1
    %v2303 = vmax.f32 %v2301, %v2302
    %v2304 = vrot.slane %v2297, 4
    %v2305 = vmax.f32 %v2297, %v2304
    %v2306 = vrot.slane %v2305, 2
    %v2307 = vmax.f32 %v2305, %v2306
    %v2308 = vrot.slane %v2307, 1
    %v2309 = vmax.f32 %v2307, %v2308
    %v2310 = vsub.f32 %v2294, %v2303
    %v2311 = vsub.f32 %v2297, %v2309
    %v2312 = vmul.f32 %v2310, 1.442695
    %v2313 = vpow.pop %v2312
    %v2314 = vmul.f32 %v2311, 1.442695
    %v2315 = vpow.pop %v2314
    %v2316 = vrot.slane %v2313, 4
    %v2317 = vadd.f32 %v2313, %v2316
    %v2318 = vrot.slane %v2317, 2
    %v2319 = vadd.f32 %v2317, %v2318
    %v2320 = vrot.slane %v2319, 1
    %v2321 = vadd.f32 %v2319, %v2320
    %v2322 = vrot.slane %v2315, 4
    %v2323 = vadd.f32 %v2315, %v2322
    %v2324 = vrot.slane %v2323, 2
    %v2325 = vadd.f32 %v2323, %v2324
    %v2326 = vrot.slane %v2325, 1
    %v2327 = vadd.f32 %v2325, %v2326
    %v2328 = vrcp.pop %v2321
    %v2329 = vmul.f32 %v2313, %v2328
    %v2330 = vrcp.pop %v2327
    %v2331 = vmul.f32 %v2315, %v2330
    %v2334 = vrot.slane %v2331, 7
    %v2335 = vsel %vm262, %v2334, %v2329
    %v2337 = vrot.slane %v2329, 1
    %v2338 = vsel %vm262, %v2331, %v2337
    %v2340 = vrot.slane %v2329, 2
    %v2341 = vrot.slane %v2331, 1
    %v2342 = vsel %vm262, %v2341, %v2340
    %v2344 = vrot.slane %v2329, 3
    %v2345 = vrot.slane %v2331, 2
    %v2346 = vsel %vm262, %v2345, %v2344
    %v2348 = vrot.slane %v2329, 4
    %v2349 = vrot.slane %v2331, 3
    %v2350 = vsel %vm262, %v2349, %v2348
    %v2352 = vrot.slane %v2329, 5
    %v2353 = vrot.slane %v2331, 4
    %v2354 = vsel %vm262, %v2353, %v2352
    %v2356 = vrot.slane %v2329, 6
    %v2357 = vrot.slane %v2331, 5
    %v2358 = vsel %vm262, %v2357, %v2356
    %v2360 = vrot.slane %v2329, 7
    %v2361 = vrot.slane %v2331, 6
    %v2362 = vsel %vm262, %v2361, %v2360
    %vm2364 = vcmask 7168
    %v2365 = vsel %vm2364, %v2335, %v2338
    %vm2366 = vcmask 15360
    %v2367 = vsel %vm2366, %v2365, %v2342
    %vm2368 = vcmask 23552
    %v2369 = vsel %vm2368, %v2367, %v2346
    %v2370 = vsel %vm81, %v2369, %v2350
    %vm2371 = vcmask 39936
    %v2372 = vsel %vm2371, %v2370, %v2354
    %vm2373 = vcmask 48128
    %v2374 = vsel %vm2373, %v2372, %v2358
    %vm2375 = vcmask 56320
    %v2376 = vsel %vm2375, %v2374, %v2362
    %vm2377 = vcmask 58368
    %2378 = vst.msk [vmem:[#allocation10] sm:$0x3] %vm2377, %v2376
    %v2379 = vmul.f32 %v2329, %v2211
    %v2380 = vmul.f32 %v2331, %v2212
    %v2381 = vsel %vm146, %v2379, 0.0
    %v2382 = vrot.slane %v2381, 4
    %v2383 = vadd.f32 %v2381, %v2382
    %v2384 = vrot.slane %v2383, 2
    %v2385 = vadd.f32 %v2383, %v2384
    %v2386 = vrot.slane %v2385, 1
    %v2387 = vadd.f32 %v2385, %v2386
    %v2388 = vsel %vm146, %v2380, 0.0
    %v2389 = vrot.slane %v2388, 4
    %v2390 = vadd.f32 %v2388, %v2389
    %v2391 = vrot.slane %v2390, 2
    %v2392 = vadd.f32 %v2390, %v2391
    %v2393 = vrot.slane %v2392, 1
    %v2394 = vadd.f32 %v2392, %v2393
    %v2395 = vpack.c.bf16 %v2387, %v2387
    %v2396 = vpack.c.bf16 %v2394, %v2394
    %v2397 = vld [vmem:[%s10] sm:$0xf]
    %v2398 = vld [vmem:[%s10 + $0x4] sm:$0xf]
    %v2399 = vld [vmem:[%s10 + $0x8] sm:$0xf]
    %v2400 = vld [vmem:[%s10 + $0xc] sm:$0xf]
    %v2401 = vld [vmem:[%s11] sm:$0x1]
    %v2403 = vlaneseq
    %v2404 = vshrl.u32 %v2403, 7
    %v2405 = vsub.s32 0, %v2404
    %v2406 = vrot.slane %v2401, %v2405
    %v2410 = vunpack.c.l.b16 %v2395
    %v2411 = vunpack.c.l.b16 %v2396
    %v2412 = vsel %vm262, %v2411, %v2410
    %v2413 = vpack.c.b16 %v2412, %v2412
    %v2418 = vunpack.c.l.b16 %v2397
    %v2419 = vunpack.c.l.b16 %v2398
    %v2420 = vunpack.c.l.b16 %v2399
    %v2421 = vunpack.c.l.b16 %v2400
    %v2422 = vpack.c.b16 %v2419, %v2418
    %v2423 = vpack.c.b16 %v2421, %v2420
    %v2427 = vsel %vm146, %v2413, 0
    %2429 = vmatprep.subr.bf16.mxu0 0
    %2430 = vmatpush1.bf16.msra.mxu0 %v2422
    %2431 = vmatprep.subr.bf16.mxu0 0
    %2432 = vmatpush1.bf16.msra.mxu0 %v2423
    %2433 = vmatprep.subr.bf16.mxu0 0
    %2434 = vmatpush1.bf16.msra.mxu0 0
    %2435 = vmatprep.subr.bf16.mxu0 0
    %2436 = vmatpush1.bf16.msra.mxu0 0
    %2437 = vmatprep.subr.bf16.mxu0 0
    %2438 = vmatpush1.bf16.msra.mxu0 0
    %2439 = vmatprep.subr.bf16.mxu0 0
    %2440 = vmatpush1.bf16.msra.mxu0 0
    %2441 = vmatprep.subr.bf16.mxu0 0
    %2442 = vmatpush1.bf16.msra.mxu0 0
    %2443 = vmatprep.subr.bf16.mxu0 0
    %2444 = vmatpush1.bf16.msra.mxu0 0
    %2445 = vmatprep.subr.bf16.mxu0 0
    %2446 = vmatpush1.bf16.msra.mxu0 0
    %2447 = vmatprep.subr.bf16.mxu0 0
    %2448 = vmatpush1.bf16.msra.mxu0 0
    %2449 = vmatprep.subr.bf16.mxu0 0
    %2450 = vmatpush1.bf16.msra.mxu0 0
    %2451 = vmatprep.subr.bf16.mxu0 0
    %2452 = vmatpush1.bf16.msra.mxu0 0
    %2453 = vmatprep.subr.bf16.mxu0 0
    %2454 = vmatpush1.bf16.msra.mxu0 0
    %2455 = vmatprep.subr.bf16.mxu0 0
    %2456 = vmatpush1.bf16.msra.mxu0 0
    %2457 = vmatprep.subr.bf16.mxu0 0
    %2458 = vmatpush1.bf16.msra.mxu0 0
    %2459 = vmatprep.subr.bf16.mxu0 0
    %2460 = vmatpush1.bf16.msra.mxu0 0
    %2461 = vmatprep.mubr.bf16.mxu0 0
    %2462 = vmatmul.mubr.bf16.gmra.mrb[0].mxu0 %v2427
    %v2463 = vpop.f32.mrb[0].mxu0
    %v2464 = vadd.f32 %v2406, %v2463
    %v2465 = vpop.f32.mrb[0].mxu0
    %v2466 = vpop.f32.mrb[0].mxu0
    %v2467 = vpop.f32.mrb[0].mxu0
    %2468 = vdwg.mxu0
    %vm2469 = vcmask 189440
    %2470 = vst.msk [vmem:[#allocation9] sm:$0x3] %vm2469, %v2464
    // Predicated region
    $region58: #{tpu_custom_call.1} parent=1 // pred_check
      _
    $region59: #{tpu_custom_call.1} parent=1 // pred_check_branch
      %2472 = sbr.rel (0) target = $region61
    $region60: #{tpu_custom_call.1} parent=1 // pred_region
      %s2474 = ssub.s32 32, 32
      %2475 = vsyncadd [#allocation6], %s2474
      %s2477 = sshll.u32 [#allocation9], 4
      %s2478 = int_to_ptr.vmem [resolvable:$true] %s2477
      %2480 = dma.vmem_to_hbm [thread:$0]  %s2478, 32, %s12, [#allocation6]
    $region61: #{tpu_custom_call.1} parent=1 // pred_fallthru
      _
    // Predicated region
    $region62: #{tpu_custom_call.1} parent=1 // pred_check
      _
    $region63: #{tpu_custom_call.1} parent=1 // pred_check_branch
      %2482 = sbr.rel (0) target = $region65
    $region64: #{tpu_custom_call.1} parent=1 // pred_region
      %s2484 = ssub.s32 32, 32
      %2485 = vsyncadd [#allocation11], %s2484
      %s2487 = sshll.u32 [#allocation10], 4
      %s2488 = int_to_ptr.vmem [resolvable:$true] %s2487
      %2490 = dma.vmem_to_hbm [thread:$0]  %s2488, 32, %s13, [#allocation11]
    $region65: #{tpu_custom_call.1} parent=1 // pred_fallthru
      _
    // Predicated region
    $region66: #{tpu_custom_call.1} parent=1 // pred_check
      _
    $region67: #{tpu_custom_call.1} parent=1 // pred_check_branch
      %2492 = sbr.rel (0) target = $region69
    $region68: #{tpu_custom_call.1} parent=1 // pred_region
      %2493 = dma.done [#allocation6], 32
    $region69: #{tpu_custom_call.1} parent=1 // pred_fallthru
      _
    // Predicated region
    $region70: #{tpu_custom_call.1} parent=1 // pred_check
      _
    $region71: #{tpu_custom_call.1} parent=1 // pred_check_branch
      %2495 = sbr.rel (0) target = $region73
    $region72: #{tpu_custom_call.1} parent=1 // pred_region
      %2496 = dma.done [#allocation11], 32
    $region73: #{tpu_custom_call.1} parent=1 // pred_fallthru
      _
    %2497 = vsyncpa [#allocation5], 1
    %2498 = vsyncpa [#allocation8], 1
    %2499 = vsyncpa [#allocation6], 1
    %2500 = vsyncpa [#allocation11], 1

</llo_original>
